<compile_context>
chip_gen: v6e
topology: v6e:2x2x1
jax: 0.10.0
libtpu: 0.0.40
codegen_flags: <defaults>
</compile_context>

<pallas_src>
import functools

import jax
import jax.numpy as jnp
from jax import lax
from jax.experimental import pallas as pl
from jax.experimental.pallas import tpu as pltpu

LANE = 128                                  # channel dims padded to lane width
_VMEM_LIMIT = 48 * 1024 * 1024              # safe on v5e/v6e (128 MiB) and v7x (64 MiB)


def _rup(x, m):
    return (x + m - 1) // m * m


def _pad_last(a, target):
    if a.shape[-1] == target:
        return a
    pads = [(0, 0)] * (a.ndim - 1) + [(0, target - a.shape[-1])]
    return jnp.pad(a, pads)


def _pad2d(a, rows, cols):
    return jnp.pad(a, ((0, rows - a.shape[0]), (0, cols - a.shape[1])))


def _cparams(sem):
    return pltpu.CompilerParams(dimension_semantics=sem,
                                vmem_limit_bytes=_VMEM_LIMIT)


def _pick_tr(ho, wo):
    """Largest row-block size that divides Ho and keeps M = TR*Wo moderate."""
    best = 1
    for t in range(1, min(ho, 64) + 1):
        if ho % t == 0 and t * wo <= 1024:
            best = t
    return best


# ----------------------------------------------------------------------------
# Kernel 1: tiled matmul + bias + ReLU   (1x1 conv with folded BN)
# ----------------------------------------------------------------------------
def _mm_kernel(x_ref, w_ref, b_ref, o_ref):
    y = jnp.dot(x_ref[...], w_ref[...],
                preferred_element_type=jnp.float32) + b_ref[...]
    o_ref[...] = jnp.maximum(y, 0.0).astype(o_ref.dtype)


def matmul_bias_relu(x2d, w2d, bias):
    """(M, K) @ (K, C) + bias + ReLU.  K, C lane multiples; M row-tiled (no pad)."""
    M, K = x2d.shape
    _, C = w2d.shape
    tm = M if M <= 1024 else 1024
    return pl.pallas_call(
        _mm_kernel,
        out_shape=jax.ShapeDtypeStruct((M, C), jnp.bfloat16),
        grid=(pl.cdiv(M, tm),),
        in_specs=[
            pl.BlockSpec((tm, K), lambda i: (i, 0)),
            pl.BlockSpec((K, C), lambda i: (0, 0)),
            pl.BlockSpec((1, C), lambda i: (0, 0)),
        ],
        out_specs=pl.BlockSpec((tm, C), lambda i: (i, 0)),
        compiler_params=_cparams(("parallel",)),
    )(x2d, w2d, bias)


# ----------------------------------------------------------------------------
# Kernel 2+3 fused: 3x3 conv + BN + ReLU, final 1x1 conv, shortcut, add, ReLU
# ----------------------------------------------------------------------------
def _fused_tail_kernel(y1_ref, x_ref, w2_ref, b2_ref, w3_ref, bt_ref, *rest,
                       stride, tr, wo, c1, ci, has_idconv):
    if has_idconv:
        wid_ref, o_ref = rest
    else:
        (o_ref,) = rest

    rb = pl.program_id(1)
    ho0 = rb * tr
    if tr % 8 == 0:
        ho0 = pl.multiple_of(ho0, 8)
    m = tr * wo

    # ---- 3x3 conv: TR output rows per step, 3 dots with K = 3*c1 -------------
    acc = jnp.zeros((m, c1), jnp.float32)
    if stride == 1:
        # y1_ref: full padded image (H+2, W+2, c1) for this batch element.
        rows = y1_ref[pl.ds(ho0, tr + 2)]                       # (tr+2, W+2, c1)
        for dy in range(3):
            slab = rows[dy:dy + tr]                             # (tr, W+2, c1)
            lhs = jnp.concatenate(
                [slab[:, 0:wo, :], slab[:, 1:1 + wo, :], slab[:, 2:2 + wo, :]],
                axis=-1).reshape(m, 3 * c1)
            acc += jnp.dot(lhs, w2_ref[dy], preferred_element_type=jnp.float32)
    else:
        # y1_ref: full padded image with row/col pairs merged into lanes,
        # shape (Ho+1, 2, Wo+1, 2*c1); lanes [0:c1]=even column, [c1:2c1]=odd.
        rows = y1_ref[pl.ds(ho0, tr + 1)]                       # (tr+1, 2, Wo+1, 2c1)
        planes = (rows[0:tr, 0], rows[0:tr, 1], rows[1:tr + 1, 0])   # dy = 0, 1, 2
        for dy in range(3):
            row = planes[dy]                                    # (tr, Wo+1, 2*c1)
            lhs = jnp.concatenate(
                [row[:, 0:wo, :],                               # taps dx = 0, 1
                 row[:, 1:1 + wo, 0:c1]],                       # tap  dx = 2
                axis=-1).reshape(m, 3 * c1)
            acc += jnp.dot(lhs, w2_ref[dy], preferred_element_type=jnp.float32)
    y2 = jnp.maximum(acc + b2_ref[...], 0.0).astype(jnp.bfloat16)

    # ---- final 1x1 conv -------------------------------------------------------
    out = jnp.dot(y2, w3_ref[...], preferred_element_type=jnp.float32)

    # ---- shortcut path (avg-pool fused in-kernel for stride 2) ----------------
    if stride == 1:
        shortcut = x_ref[...].astype(jnp.float32).reshape(m, ci)
    else:
        xb = x_ref[...].astype(jnp.float32)                     # (tr, 2, wo, 2*ci)
        shortcut = 0.25 * (xb[:, 0, :, 0:ci] + xb[:, 0, :, ci:2 * ci] +
                           xb[:, 1, :, 0:ci] + xb[:, 1, :, ci:2 * ci])
        shortcut = shortcut.reshape(m, ci)
    if has_idconv:
        out = out + jnp.dot(shortcut.astype(jnp.bfloat16), wid_ref[...],
                            preferred_element_type=jnp.float32)
    else:
        out = out + shortcut            # ni == nf: identity add, no MXU work

    out = jnp.maximum(out + bt_ref[...], 0.0)
    o_ref[...] = out.reshape(tr, wo, -1).astype(o_ref.dtype)


# ----------------------------------------------------------------------------
# ResBlock forward (Pallas path)
# ----------------------------------------------------------------------------
def resblock_forward(x_nchw, p1, p2, p3, pid, *, stride, ni, nf):
    N, _, H, W = x_nchw.shape
    nh = nf // 4
    nip, c1p, nfp = _rup(ni, LANE), _rup(nh, LANE), _rup(nf, LANE)
    has_idconv = ni != nf
    if stride != 1:
        # TODO(synk): AvgPool2d ceil_mode with odd H/W (partial windows) unhandled.
        assert H % 2 == 0 and W % 2 == 0
    if not has_idconv:
        assert nip == nfp
    Ho, Wo = H // stride, W // stride

    # glue: NCHW -> NHWC, channel-pad, bf16.  (In a full network this conversion
    # would be hoisted to the network boundary and activations kept NHWC/bf16.)
    x0 = jnp.transpose(x_nchw, (0, 2, 3, 1))
    x0 = _pad_last(x0, nip).astype(jnp.bfloat16)

    # --- fold BN scale into conv weights, pad to lane multiples, cast bf16 ---
    w1, s1, b1 = p1
    w1m = _pad2d(w1[:, :, 0, 0].T * s1[None, :], nip, c1p).astype(jnp.bfloat16)
    b1p = _pad_last(b1.reshape(1, -1), c1p).astype(jnp.float32)

    w2, s2, b2 = p2
    w2t = jnp.transpose(w2, (2, 3, 1, 0)) * s2[None, None, None, :]   # (dy,dx,ci,co)
    w2p = jnp.pad(w2t, ((0, 0), (0, 0), (0, c1p - nh), (0, c1p - nh)))
    w2c = w2p.reshape(3, 3 * c1p, c1p).astype(jnp.bfloat16)   # dx taps stacked in K
    b2p = _pad_last(b2.reshape(1, -1), c1p).astype(jnp.float32)

    w3, s3, b3 = p3
    w3m = _pad2d(w3[:, :, 0, 0].T * s3[None, :], c1p, nfp).astype(jnp.bfloat16)

    extra = []
    bt = b3
    if has_idconv:
        wi, si, bi = pid
        wim = _pad2d(wi[:, :, 0, 0].T * si[None, :], nip, nfp).astype(jnp.bfloat16)
        extra = [wim]
        bt = b3 + bi                                   # fold idconv bias into b3
    btp = _pad_last(bt.reshape(1, -1), nfp).astype(jnp.float32)

    # --- stage 1: 1x1 conv + BN + ReLU as one big lane-dense matmul -----------
    y1 = matmul_bias_relu(x0.reshape(N * H * W, nip), w1m, b1p)
    y1 = y1.reshape(N, H, W, c1p)

    # --- prepare inputs of the fused 3x3+tail kernel ---------------------------
    # Single pad pass for the 3x3 halo; for stride 2 the row/column pairs are then
    # merged into lanes by FREE reshapes (no strided slicing, no HBM parity planes).
    y1p = jnp.pad(y1, ((0, 0), (1, 1), (1, 1), (0, 0)))
    if stride == 1:
        y1m, xm = y1p, x0
        y1_spec = pl.BlockSpec((None, H + 2, W + 2, c1p),
                               lambda n, r: (n, 0, 0, 0))
        tr = _pick_tr(Ho, Wo)
        x_spec = pl.BlockSpec((None, tr, W, nip), lambda n, r: (n, r, 0, 0))
    else:
        y1m = y1p.reshape(N, (H + 2) // 2, 2, (W + 2) // 2, 2 * c1p)
        xm = x0.reshape(N, H // 2, 2, W // 2, 2 * nip)
        y1_spec = pl.BlockSpec((None, (H + 2) // 2, 2, (W + 2) // 2, 2 * c1p),
                               lambda n, r: (n, 0, 0, 0, 0))
        tr = _pick_tr(Ho, Wo)
        x_spec = pl.BlockSpec((None, tr, 2, Wo, 2 * nip),
                              lambda n, r: (n, r, 0, 0, 0))
    n_row_blocks = Ho // tr

    in_specs = [
        y1_spec,
        x_spec,
        pl.BlockSpec((3, 3 * c1p, c1p), lambda n, r: (0, 0, 0)),
        pl.BlockSpec((1, c1p), lambda n, r: (0, 0)),
        pl.BlockSpec((c1p, nfp), lambda n, r: (0, 0)),
        pl.BlockSpec((1, nfp), lambda n, r: (0, 0)),
    ]
    if has_idconv:
        in_specs.append(pl.BlockSpec((nip, nfp), lambda n, r: (0, 0)))

    kern = functools.partial(_fused_tail_kernel, stride=stride, tr=tr, wo=Wo,
                             c1=c1p, ci=nip, has_idconv=has_idconv)
    out = pl.pallas_call(
        kern,
        out_shape=jax.ShapeDtypeStruct((N, Ho, Wo, nfp), jnp.bfloat16),
        grid=(N, n_row_blocks),
        in_specs=in_specs,
        out_specs=pl.BlockSpec((None, tr, Wo, nfp), lambda n, r: (n, r, 0, 0)),
        compiler_params=_cparams(("parallel", "parallel")),
    )(y1m, xm, w2c, b2p, w3m, btp, *extra)

    # once-per-block exit glue (would be hoisted out in a full NHWC/bf16 network)
    out = out[..., :nf].astype(jnp.float32)
    return jnp.transpose(out, (0, 3, 1, 2))            # NHWC -> NCHW


# ----------------------------------------------------------------------------
# Pure-JAX reference (for correctness check)
# ----------------------------------------------------------------------------
def _ref_convlayer(x_nchw, w, scale, shift, *, stride, relu):
    ks = w.shape[-1]
    pad = ks // 2
    y = lax.conv_general_dilated(
        x_nchw, w, (stride, stride), [(pad, pad), (pad, pad)],
        dimension_numbers=("NCHW", "OIHW", "NCHW"),
    )
    y = y * scale[None, :, None, None] + shift[None, :, None, None]
    if relu:
        y = jnp.maximum(y, 0.0)
    return y


def resblock_reference(x, p1, p2, p3, pid, stride, ni, nf):
    y = _ref_convlayer(x, *p1, stride=1, relu=True)
    y = _ref_convlayer(y, *p2, stride=stride, relu=True)
    y = _ref_convlayer(y, *p3, stride=1, relu=False)
    idp = x
    if stride != 1:
        N, C, H, W = x.shape
        idp = x.reshape(N, C, H // 2, 2, W // 2, 2).mean(axis=(3, 5))
    ido = idp if ni == nf else _ref_convlayer(idp, *pid, stride=1, relu=False)
    return jnp.maximum(y + ido, 0.0)


# ----------------------------------------------------------------------------
# Deterministic parameter construction (ConvLayer = conv(no bias) + BN folded)
# ----------------------------------------------------------------------------
def make_convlayer_params(key, cin, cout, ks):
    k1, k2, k3, k4, k5 = jax.random.split(key, 5)
    w = jax.random.normal(k1, (cout, cin, ks, ks), jnp.float32) * 0.1
    gamma = jax.random.uniform(k2, (cout,), jnp.float32, 0.5, 1.5)
    beta = jax.random.normal(k3, (cout,), jnp.float32) * 0.1
    rmean = jax.random.normal(k4, (cout,), jnp.float32) * 0.1
    rvar = jax.random.uniform(k5, (cout,), jnp.float32, 0.5, 1.5)
    scale = gamma / jnp.sqrt(rvar + 1e-5)
    shift = beta - rmean * scale
    return w, scale, shift


if __name__ == "__main__":
    def run_case(key, N, ni, nf, H, W, stride):
        kx, k1, k2, k3, k4 = jax.random.split(key, 5)
        x = jax.random.normal(kx, (N, ni, H, W), jnp.float32)
        p1 = make_convlayer_params(k1, ni, nf // 4, 1)       # ConvLayer(ni, nf//4, 1)
        p2 = make_convlayer_params(k2, nf // 4, nf // 4, 3)  # ConvLayer(nf//4, nf//4, stride)
        p3 = make_convlayer_params(k3, nf // 4, nf, 1)       # ConvLayer(nf//4, nf, 1)
        pid = make_convlayer_params(k4, ni, nf, 1)           # idconv (used iff ni != nf)

        fwd = jax.jit(functools.partial(resblock_forward, stride=stride, ni=ni, nf=nf))
        out = jax.block_until_ready(fwd(x, p1, p2, p3, pid))
        ref = resblock_reference(x, p1, p2, p3, pid, stride, ni, nf)
        assert out.shape == ref.shape == (N, nf, H // stride, W // stride)
        if not bool(jnp.allclose(out, ref, rtol=2e-2, atol=2e-2)):
            err = float(jnp.max(jnp.abs(out - ref)))
            raise SystemExit(
                f"mismatch (stride={stride}, ni={ni}, nf={nf}): max abs err = {err}")

    key = jax.random.PRNGKey(0)
    ka, kb = jax.random.split(key)
    # downsampling block: stride 2 -> fused avg-pool + idconv shortcut
    run_case(ka, N=2, ni=8, nf=16, H=16, W=16, stride=2)
    # identity block: stride 1, ni == nf -> shortcut added without any idconv matmul
    run_case(kb, N=2, ni=16, nf=16, H=16, W=16, stride=1)
    print("KERNEL_OK")
</pallas_src>

<mosaic_0001>
module attributes {stable_mosaic.version = 11 : i64} {
  func.func @_mm_kernel(%arg0: i32, %arg1: memref<512x128xbf16, #tpu.memory_space<vmem>>, %arg2: memref<128x128xbf16, #tpu.memory_space<vmem>>, %arg3: memref<1x128xf32, #tpu.memory_space<vmem>>, %arg4: memref<512x128xbf16, #tpu.memory_space<vmem>>) attributes {dimension_semantics = [#tpu.dimension_semantics<parallel>], iteration_bounds = array<i64: 1>, scalar_prefetch = 0 : i64, scratch_operands = 0 : i64, tpu.core_type = #tpu.core_type<tc>, window_params = [{transform_indices = @transform_0, window_bounds = array<i64: 512, 128>}, {pipeline_mode = #tpu.pipeline_mode<synchronous>, transform_indices = @transform_1, window_bounds = array<i64: 128, 128>}, {pipeline_mode = #tpu.pipeline_mode<synchronous>, transform_indices = @transform_2, window_bounds = array<i64: 1, 128>}, {transform_indices = @transform_3, window_bounds = array<i64: 512, 128>}]} {
    %c0 = arith.constant 0 : index
    %c0_0 = arith.constant 0 : index
    %0 = vector.load %arg1[%c0, %c0_0] : memref<512x128xbf16, #tpu.memory_space<vmem>>, vector<512x128xbf16>
    %c0_1 = arith.constant 0 : index
    %c0_2 = arith.constant 0 : index
    %1 = vector.load %arg2[%c0_1, %c0_2] : memref<128x128xbf16, #tpu.memory_space<vmem>>, vector<128x128xbf16>
    %cst = arith.constant dense<0.000000e+00> : vector<512x128xf32>
    %2 = tpu.matmul %0, %1, %cst {dimension_numbers = #tpu.dot_dimension_numbers<[1], [0], [0], [1], [0, 0, 1, 1], [], []>} : vector<512x128xbf16>, vector<128x128xbf16>, vector<512x128xf32> -> vector<512x128xf32>
    %c0_3 = arith.constant 0 : index
    %c0_4 = arith.constant 0 : index
    %3 = vector.load %arg3[%c0_3, %c0_4] : memref<1x128xf32, #tpu.memory_space<vmem>>, vector<1x128xf32>
    %4 = vector.broadcast %3 : vector<1x128xf32> to vector<512x128xf32>
    %5 = arith.addf %2, %4 : vector<512x128xf32>
    %cst_5 = arith.constant 0.000000e+00 : f32
    %6 = vector.broadcast %cst_5 : f32 to vector<512x128xf32>
    %7 = arith.maximumf %5, %6 : vector<512x128xf32>
    %8 = arith.truncf %7 : vector<512x128xf32> to vector<512x128xbf16>
    %c0_6 = arith.constant 0 : index
    %c0_7 = arith.constant 0 : index
    %9 = vector.load %arg4[%c0_6, %c0_7] : memref<512x128xbf16, #tpu.memory_space<vmem>>, vector<512x128xbf16>
    tpu.vector_store %arg4[%c0_6, %c0_7], %8 {strides = array<i32>} : memref<512x128xbf16, #tpu.memory_space<vmem>>, vector<512x128xbf16>,
    return
  }
  func.func @transform_0(%arg0: i32) -> (i32, i32) {
    %c0_i32 = arith.constant 0 : i32
    %c0_i32_0 = arith.constant 0 : i32
    return %arg0, %c0_i32 : i32, i32
  }
  func.func @transform_1(%arg0: i32) -> (i32, i32) {
    %c0_i32 = arith.constant 0 : i32
    %c0_i32_0 = arith.constant 0 : i32
    %c0_i32_1 = arith.constant 0 : i32
    return %c0_i32, %c0_i32_0 : i32, i32
  }
  func.func @transform_2(%arg0: i32) -> (i32, i32) {
    %c0_i32 = arith.constant 0 : i32
    %c0_i32_0 = arith.constant 0 : i32
    %c0_i32_1 = arith.constant 0 : i32
    return %c0_i32, %c0_i32_0 : i32, i32
  }
  func.func @transform_3(%arg0: i32) -> (i32, i32) {
    %c0_i32 = arith.constant 0 : i32
    %c0_i32_0 = arith.constant 0 : i32
    return %arg0, %c0_i32 : i32, i32
  }
}

module attributes {stable_mosaic.version = 11 : i64} {
  func.func @_fused_tail_kernel(%arg0: i32, %arg1: i32, %arg2: memref<1x9x2x9x256xbf16, #tpu.memory_space<vmem>>, %arg3: memref<1x8x2x8x256xbf16, #tpu.memory_space<vmem>>, %arg4: memref<3x384x128xbf16, #tpu.memory_space<vmem>>, %arg5: memref<1x128xf32, #tpu.memory_space<vmem>>, %arg6: memref<128x128xbf16, #tpu.memory_space<vmem>>, %arg7: memref<1x128xf32, #tpu.memory_space<vmem>>, %arg8: memref<128x128xbf16, #tpu.memory_space<vmem>>, %arg9: memref<1x8x8x128xbf16, #tpu.memory_space<vmem>>) attributes {dimension_semantics = [#tpu.dimension_semantics<parallel>, #tpu.dimension_semantics<parallel>], iteration_bounds = array<i64: 2, 1>, scalar_prefetch = 0 : i64, scratch_operands = 0 : i64, tpu.core_type = #tpu.core_type<tc>, window_params = [{transform_indices = @transform_0, window_bounds = array<i64: 1, 9, 2, 9, 256>}, {transform_indices = @transform_1, window_bounds = array<i64: 1, 8, 2, 8, 256>}, {pipeline_mode = #tpu.pipeline_mode<synchronous>, transform_indices = @transform_2, window_bounds = array<i64: 3, 384, 128>}, {pipeline_mode = #tpu.pipeline_mode<synchronous>, transform_indices = @transform_3, window_bounds = array<i64: 1, 128>}, {pipeline_mode = #tpu.pipeline_mode<synchronous>, transform_indices = @transform_4, window_bounds = array<i64: 128, 128>}, {pipeline_mode = #tpu.pipeline_mode<synchronous>, transform_indices = @transform_5, window_bounds = array<i64: 1, 128>}, {pipeline_mode = #tpu.pipeline_mode<synchronous>, transform_indices = @transform_6, window_bounds = array<i64: 128, 128>}, {transform_indices = @transform_7, window_bounds = array<i64: 1, 8, 8, 128>}]} {
    %c8_i32 = arith.constant 8 : i32
    %0 = arith.muli %arg1, %c8_i32 : i32
    %1 = tpu.assume_multiple %0, 8 : i32
    %cst = arith.constant 0.000000e+00 : f32
    %2 = vector.broadcast %cst : f32 to vector<64x128xf32>
    %c0 = arith.constant 0 : index
    %3 = arith.index_cast %1 : i32 to index
    %c0_0 = arith.constant 0 : index
    %c0_1 = arith.constant 0 : index
    %c0_2 = arith.constant 0 : index
    %4 = vector.load %arg2[%c0, %3, %c0_0, %c0_1, %c0_2] : memref<1x9x2x9x256xbf16, #tpu.memory_space<vmem>>, vector<1x9x2x9x256xbf16>
    %5 = vector.shape_cast %4 : vector<1x9x2x9x256xbf16> to vector<9x2x9x256xbf16>
    %6 = vector.extract_strided_slice %5 {offsets = [0, 0, 0, 0], sizes = [8, 1, 9, 256], strides = [1, 1, 1, 1]} : vector<9x2x9x256xbf16> to vector<8x1x9x256xbf16>
    %7 = vector.shape_cast %6 : vector<8x1x9x256xbf16> to vector<8x9x256xbf16>
    %8 = vector.extract_strided_slice %5 {offsets = [0, 1, 0, 0], sizes = [8, 1, 9, 256], strides = [1, 1, 1, 1]} : vector<9x2x9x256xbf16> to vector<8x1x9x256xbf16>
    %9 = vector.shape_cast %8 : vector<8x1x9x256xbf16> to vector<8x9x256xbf16>
    %10 = vector.extract_strided_slice %5 {offsets = [1, 0, 0, 0], sizes = [8, 1, 9, 256], strides = [1, 1, 1, 1]} : vector<9x2x9x256xbf16> to vector<8x1x9x256xbf16>
    %11 = vector.shape_cast %10 : vector<8x1x9x256xbf16> to vector<8x9x256xbf16>
    %12 = vector.extract_strided_slice %7 {offsets = [0, 0, 0], sizes = [8, 8, 256], strides = [1, 1, 1]} : vector<8x9x256xbf16> to vector<8x8x256xbf16>
    %13 = vector.extract_strided_slice %7 {offsets = [0, 1, 0], sizes = [8, 8, 128], strides = [1, 1, 1]} : vector<8x9x256xbf16> to vector<8x8x128xbf16>
    %14 = tpu.concatenate %12, %13 in 2 : vector<8x8x256xbf16>, vector<8x8x128xbf16> -> vector<8x8x384xbf16>
    %15 = vector.shape_cast %14 : vector<8x8x384xbf16> to vector<64x384xbf16>
    %c0_3 = arith.constant 0 : index
    %c0_4 = arith.constant 0 : index
    %c0_5 = arith.constant 0 : index
    %16 = vector.load %arg4[%c0_3, %c0_4, %c0_5] : memref<3x384x128xbf16, #tpu.memory_space<vmem>>, vector<1x384x128xbf16>
    %17 = vector.shape_cast %16 : vector<1x384x128xbf16> to vector<384x128xbf16>
    %cst_6 = arith.constant dense<0.000000e+00> : vector<64x128xf32>
    %18 = tpu.matmul %15, %17, %cst_6 {dimension_numbers = #tpu.dot_dimension_numbers<[1], [0], [0], [1], [0, 0, 1, 1], [], []>} : vector<64x384xbf16>, vector<384x128xbf16>, vector<64x128xf32> -> vector<64x128xf32>
    %19 = arith.addf %2, %18 : vector<64x128xf32>
    %20 = vector.extract_strided_slice %9 {offsets = [0, 0, 0], sizes = [8, 8, 256], strides = [1, 1, 1]} : vector<8x9x256xbf16> to vector<8x8x256xbf16>
    %21 = vector.extract_strided_slice %9 {offsets = [0, 1, 0], sizes = [8, 8, 128], strides = [1, 1, 1]} : vector<8x9x256xbf16> to vector<8x8x128xbf16>
    %22 = tpu.concatenate %20, %21 in 2 : vector<8x8x256xbf16>, vector<8x8x128xbf16> -> vector<8x8x384xbf16>
    %23 = vector.shape_cast %22 : vector<8x8x384xbf16> to vector<64x384xbf16>
    %c1 = arith.constant 1 : index
    %c0_7 = arith.constant 0 : index
    %c0_8 = arith.constant 0 : index
    %24 = vector.load %arg4[%c1, %c0_7, %c0_8] : memref<3x384x128xbf16, #tpu.memory_space<vmem>>, vector<1x384x128xbf16>
    %25 = vector.shape_cast %24 : vector<1x384x128xbf16> to vector<384x128xbf16>
    %cst_9 = arith.constant dense<0.000000e+00> : vector<64x128xf32>
    %26 = tpu.matmul %23, %25, %cst_9 {dimension_numbers = #tpu.dot_dimension_numbers<[1], [0], [0], [1], [0, 0, 1, 1], [], []>} : vector<64x384xbf16>, vector<384x128xbf16>, vector<64x128xf32> -> vector<64x128xf32>
    %27 = arith.addf %19, %26 : vector<64x128xf32>
    %28 = vector.extract_strided_slice %11 {offsets = [0, 0, 0], sizes = [8, 8, 256], strides = [1, 1, 1]} : vector<8x9x256xbf16> to vector<8x8x256xbf16>
    %29 = vector.extract_strided_slice %11 {offsets = [0, 1, 0], sizes = [8, 8, 128], strides = [1, 1, 1]} : vector<8x9x256xbf16> to vector<8x8x128xbf16>
    %30 = tpu.concatenate %28, %29 in 2 : vector<8x8x256xbf16>, vector<8x8x128xbf16> -> vector<8x8x384xbf16>
    %31 = vector.shape_cast %30 : vector<8x8x384xbf16> to vector<64x384xbf16>
    %c2 = arith.constant 2 : index
    %c0_10 = arith.constant 0 : index
    %c0_11 = arith.constant 0 : index
    %32 = vector.load %arg4[%c2, %c0_10, %c0_11] : memref<3x384x128xbf16, #tpu.memory_space<vmem>>, vector<1x384x128xbf16>
    %33 = vector.shape_cast %32 : vector<1x384x128xbf16> to vector<384x128xbf16>
    %cst_12 = arith.constant dense<0.000000e+00> : vector<64x128xf32>
    %34 = tpu.matmul %31, %33, %cst_12 {dimension_numbers = #tpu.dot_dimension_numbers<[1], [0], [0], [1], [0, 0, 1, 1], [], []>} : vector<64x384xbf16>, vector<384x128xbf16>, vector<64x128xf32> -> vector<64x128xf32>
    %35 = arith.addf %27, %34 : vector<64x128xf32>
    %c0_13 = arith.constant 0 : index
    %c0_14 = arith.constant 0 : index
    %36 = vector.load %arg5[%c0_13, %c0_14] : memref<1x128xf32, #tpu.memory_space<vmem>>, vector<1x128xf32>
    %37 = vector.broadcast %36 : vector<1x128xf32> to vector<64x128xf32>
    %38 = arith.addf %35, %37 : vector<64x128xf32>
    %cst_15 = arith.constant 0.000000e+00 : f32
    %39 = vector.broadcast %cst_15 : f32 to vector<64x128xf32>
    %40 = arith.maximumf %38, %39 : vector<64x128xf32>
    %41 = arith.truncf %40 : vector<64x128xf32> to vector<64x128xbf16>
    %c0_16 = arith.constant 0 : index
    %c0_17 = arith.constant 0 : index
    %42 = vector.load %arg6[%c0_16, %c0_17] : memref<128x128xbf16, #tpu.memory_space<vmem>>, vector<128x128xbf16>
    %cst_18 = arith.constant dense<0.000000e+00> : vector<64x128xf32>
    %43 = tpu.matmul %41, %42, %cst_18 {dimension_numbers = #tpu.dot_dimension_numbers<[1], [0], [0], [1], [0, 0, 1, 1], [], []>} : vector<64x128xbf16>, vector<128x128xbf16>, vector<64x128xf32> -> vector<64x128xf32>
    %c0_19 = arith.constant 0 : index
    %c0_20 = arith.constant 0 : index
    %c0_21 = arith.constant 0 : index
    %c0_22 = arith.constant 0 : index
    %c0_23 = arith.constant 0 : index
    %44 = vector.load %arg3[%c0_19, %c0_20, %c0_21, %c0_22, %c0_23] : memref<1x8x2x8x256xbf16, #tpu.memory_space<vmem>>, vector<1x8x2x8x256xbf16>
    %45 = vector.shape_cast %44 : vector<1x8x2x8x256xbf16> to vector<8x2x8x256xbf16>
    %46 = arith.extf %45 : vector<8x2x8x256xbf16> to vector<8x2x8x256xf32>
    %47 = vector.extract_strided_slice %46 {offsets = [0, 0, 0, 0], sizes = [8, 1, 8, 128], strides = [1, 1, 1, 1]} : vector<8x2x8x256xf32> to vector<8x1x8x128xf32>
    %48 = vector.shape_cast %47 : vector<8x1x8x128xf32> to vector<8x8x128xf32>
    %49 = vector.extract_strided_slice %46 {offsets = [0, 0, 0, 128], sizes = [8, 1, 8, 128], strides = [1, 1, 1, 1]} : vector<8x2x8x256xf32> to vector<8x1x8x128xf32>
    %50 = vector.shape_cast %49 : vector<8x1x8x128xf32> to vector<8x8x128xf32>
    %51 = arith.addf %48, %50 : vector<8x8x128xf32>
    %52 = vector.extract_strided_slice %46 {offsets = [0, 1, 0, 0], sizes = [8, 1, 8, 128], strides = [1, 1, 1, 1]} : vector<8x2x8x256xf32> to vector<8x1x8x128xf32>
    %53 = vector.shape_cast %52 : vector<8x1x8x128xf32> to vector<8x8x128xf32>
    %54 = arith.addf %51, %53 : vector<8x8x128xf32>
    %55 = vector.extract_strided_slice %46 {offsets = [0, 1, 0, 128], sizes = [8, 1, 8, 128], strides = [1, 1, 1, 1]} : vector<8x2x8x256xf32> to vector<8x1x8x128xf32>
    %56 = vector.shape_cast %55 : vector<8x1x8x128xf32> to vector<8x8x128xf32>
    %57 = arith.addf %54, %56 : vector<8x8x128xf32>
    %cst_24 = arith.constant 2.500000e-01 : f32
    %58 = vector.broadcast %cst_24 : f32 to vector<8x8x128xf32>
    %59 = arith.mulf %58, %57 : vector<8x8x128xf32>
    %60 = vector.shape_cast %59 : vector<8x8x128xf32> to vector<64x128xf32>
    %61 = arith.truncf %60 : vector<64x128xf32> to vector<64x128xbf16>
    %c0_25 = arith.constant 0 : index
    %c0_26 = arith.constant 0 : index
    %62 = vector.load %arg8[%c0_25, %c0_26] : memref<128x128xbf16, #tpu.memory_space<vmem>>, vector<128x128xbf16>
    %cst_27 = arith.constant dense<0.000000e+00> : vector<64x128xf32>
    %63 = tpu.matmul %61, %62, %cst_27 {dimension_numbers = #tpu.dot_dimension_numbers<[1], [0], [0], [1], [0, 0, 1, 1], [], []>} : vector<64x128xbf16>, vector<128x128xbf16>, vector<64x128xf32> -> vector<64x128xf32>
    %64 = arith.addf %43, %63 : vector<64x128xf32>
    %c0_28 = arith.constant 0 : index
    %c0_29 = arith.constant 0 : index
    %65 = vector.load %arg7[%c0_28, %c0_29] : memref<1x128xf32, #tpu.memory_space<vmem>>, vector<1x128xf32>
    %66 = vector.broadcast %65 : vector<1x128xf32> to vector<64x128xf32>
    %67 = arith.addf %64, %66 : vector<64x128xf32>
    %cst_30 = arith.constant 0.000000e+00 : f32
    %68 = vector.broadcast %cst_30 : f32 to vector<64x128xf32>
    %69 = arith.maximumf %67, %68 : vector<64x128xf32>
    %70 = vector.shape_cast %69 : vector<64x128xf32> to vector<8x8x128xf32>
    %71 = arith.truncf %70 : vector<8x8x128xf32> to vector<8x8x128xbf16>
    %c0_31 = arith.constant 0 : index
    %c0_32 = arith.constant 0 : index
    %c0_33 = arith.constant 0 : index
    %c0_34 = arith.constant 0 : index
    %72 = vector.load %arg9[%c0_31, %c0_32, %c0_33, %c0_34] : memref<1x8x8x128xbf16, #tpu.memory_space<vmem>>, vector<1x8x8x128xbf16>
    %73 = vector.shape_cast %72 : vector<1x8x8x128xbf16> to vector<8x8x128xbf16>
    %74 = vector.shape_cast %71 : vector<8x8x128xbf16> to vector<1x8x8x128xbf16>
    tpu.vector_store %arg9[%c0_31, %c0_32, %c0_33, %c0_34], %74 {strides = array<i32>} : memref<1x8x8x128xbf16, #tpu.memory_space<vmem>>, vector<1x8x8x128xbf16>,
    return
  }
  func.func @transform_0(%arg0: i32, %arg1: i32) -> (i32, i32, i32, i32, i32) {
    %c0_i32 = arith.constant 0 : i32
    %c0_i32_0 = arith.constant 0 : i32
    %c0_i32_1 = arith.constant 0 : i32
    %c0_i32_2 = arith.constant 0 : i32
    %c0_i32_3 = arith.constant 0 : i32
    return %arg0, %c0_i32, %c0_i32_0, %c0_i32_1, %c0_i32_2 : i32, i32, i32, i32, i32
  }
  func.func @transform_1(%arg0: i32, %arg1: i32) -> (i32, i32, i32, i32, i32) {
    %c0_i32 = arith.constant 0 : i32
    %c0_i32_0 = arith.constant 0 : i32
    %c0_i32_1 = arith.constant 0 : i32
    %c0_i32_2 = arith.constant 0 : i32
    return %arg0, %arg1, %c0_i32, %c0_i32_0, %c0_i32_1 : i32, i32, i32, i32, i32
  }
  func.func @transform_2(%arg0: i32, %arg1: i32) -> (i32, i32, i32) {
    %c0_i32 = arith.constant 0 : i32
    %c0_i32_0 = arith.constant 0 : i32
    %c0_i32_1 = arith.constant 0 : i32
    %c0_i32_2 = arith.constant 0 : i32
    return %c0_i32, %c0_i32_0, %c0_i32_1 : i32, i32, i32
  }
  func.func @transform_3(%arg0: i32, %arg1: i32) -> (i32, i32) {
    %c0_i32 = arith.constant 0 : i32
    %c0_i32_0 = arith.constant 0 : i32
    %c0_i32_1 = arith.constant 0 : i32
    return %c0_i32, %c0_i32_0 : i32, i32
  }
  func.func @transform_4(%arg0: i32, %arg1: i32) -> (i32, i32) {
    %c0_i32 = arith.constant 0 : i32
    %c0_i32_0 = arith.constant 0 : i32
    %c0_i32_1 = arith.constant 0 : i32
    return %c0_i32, %c0_i32_0 : i32, i32
  }
  func.func @transform_5(%arg0: i32, %arg1: i32) -> (i32, i32) {
    %c0_i32 = arith.constant 0 : i32
    %c0_i32_0 = arith.constant 0 : i32
    %c0_i32_1 = arith.constant 0 : i32
    return %c0_i32, %c0_i32_0 : i32, i32
  }
  func.func @transform_6(%arg0: i32, %arg1: i32) -> (i32, i32) {
    %c0_i32 = arith.constant 0 : i32
    %c0_i32_0 = arith.constant 0 : i32
    %c0_i32_1 = arith.constant 0 : i32
    return %c0_i32, %c0_i32_0 : i32, i32
  }
  func.func @transform_7(%arg0: i32, %arg1: i32) -> (i32, i32, i32, i32) {
    %c0_i32 = arith.constant 0 : i32
    %c0_i32_0 = arith.constant 0 : i32
    %c0_i32_1 = arith.constant 0 : i32
    return %arg0, %arg1, %c0_i32, %c0_i32_0 : i32, i32, i32, i32
  }
}

</mosaic_0001>

<llo_original>
// kernel: resblock_forward.2
$region0: #{resblock_forward.2}
  #allocation0 [shape = 'u32[]', space=smem, size = 0x4, offset = 0x4, fixed_abs, tag = 'smem constant byte address 0x4 - core index']
  #allocation1 [shape = 'u32[144,128]{1,0:T(1,128)}', space=vmem, size = 0x12000, scoped, tag = 'internal scratch']
  %s0 = inlined_call_operand.vmem [shape: bf16[512,128], index: 0, kind: input, shape index: {}]
  %s1 = inlined_call_operand.vmem [shape: bf16[128,128], index: 1, kind: input, shape index: {}]
  %s2 = inlined_call_operand.vmem [shape: f32[1,128], index: 2, kind: input, shape index: {}]
  %s3 = inlined_call_operand.vmem [shape: bf16[512,128], index: 3, kind: output, shape index: {}]
  %s4 = sld [smem:[#allocation0]]
  $region22: #{resblock_forward.2} parent=0
    _
  %s6 = ssub.s32 1, %s4
  %s7 = scalar_select 0, %s6, %s4
  // Predicated region
  $region2: #{resblock_forward.2} parent=0 // pred_check
    _
  $region3: #{resblock_forward.2} parent=0 // pred_check_branch
    %9 = sbr.rel (0) target = $region5
  $region4: #{resblock_forward.2} parent=0 // pred_region
    _
  $region5: #{resblock_forward.2} parent=0 // pred_fallthru
    _
  // Predicated region
  $region6: #{resblock_forward.2} parent=0 // pred_check
    _
  $region7: #{resblock_forward.2} parent=0 // pred_check_branch
    %11 = sbr.rel (0) target = $region9
  $region8: #{resblock_forward.2} parent=0 // pred_region
    _
  $region9: #{resblock_forward.2} parent=0 // pred_fallthru
    _
  // Predicated region
  $region10: #{resblock_forward.2} parent=0 // pred_check
    _
  $region11: #{resblock_forward.2} parent=0 // pred_check_branch
    %13 = sbr.rel (0) target = $region13
  $region12: #{resblock_forward.2} parent=0 // pred_region
    _
  $region13: #{resblock_forward.2} parent=0 // pred_fallthru
    _
  %v15 = vld [vmem:[%s0] sm:$0xf]
  %v16 = vld [vmem:[%s0 + $0x4] sm:$0xf]
  %v17 = vld [vmem:[%s0 + $0x8] sm:$0xf]
  %v18 = vld [vmem:[%s0 + $0xc] sm:$0xf]
  %v19 = vld [vmem:[%s0 + $0x10] sm:$0xf]
  %v20 = vld [vmem:[%s0 + $0x14] sm:$0xf]
  %v21 = vld [vmem:[%s0 + $0x18] sm:$0xf]
  %v22 = vld [vmem:[%s0 + $0x1c] sm:$0xf]
  %v23 = vld [vmem:[%s0 + $0x20] sm:$0xf]
  %v24 = vld [vmem:[%s0 + $0x24] sm:$0xf]
  %v25 = vld [vmem:[%s0 + $0x28] sm:$0xf]
  %v26 = vld [vmem:[%s0 + $0x2c] sm:$0xf]
  %v27 = vld [vmem:[%s0 + $0x30] sm:$0xf]
  %v28 = vld [vmem:[%s0 + $0x34] sm:$0xf]
  %v29 = vld [vmem:[%s0 + $0x38] sm:$0xf]
  %v30 = vld [vmem:[%s0 + $0x3c] sm:$0xf]
  %v31 = vld [vmem:[%s0 + $0x40] sm:$0xf]
  %v32 = vld [vmem:[%s0 + $0x44] sm:$0xf]
  %v33 = vld [vmem:[%s0 + $0x48] sm:$0xf]
  %v34 = vld [vmem:[%s0 + $0x4c] sm:$0xf]
  %v35 = vld [vmem:[%s0 + $0x50] sm:$0xf]
  %v36 = vld [vmem:[%s0 + $0x54] sm:$0xf]
  %v37 = vld [vmem:[%s0 + $0x58] sm:$0xf]
  %v38 = vld [vmem:[%s0 + $0x5c] sm:$0xf]
  %v39 = vld [vmem:[%s0 + $0x60] sm:$0xf]
  %v40 = vld [vmem:[%s0 + $0x64] sm:$0xf]
  %v41 = vld [vmem:[%s0 + $0x68] sm:$0xf]
  %v42 = vld [vmem:[%s0 + $0x6c] sm:$0xf]
  %v43 = vld [vmem:[%s0 + $0x70] sm:$0xf]
  %v44 = vld [vmem:[%s0 + $0x74] sm:$0xf]
  %v45 = vld [vmem:[%s0 + $0x78] sm:$0xf]
  %v46 = vld [vmem:[%s0 + $0x7c] sm:$0xf]
  %v47 = vld [vmem:[%s0 + $0x80] sm:$0xf]
  %v48 = vld [vmem:[%s0 + $0x84] sm:$0xf]
  %v49 = vld [vmem:[%s0 + $0x88] sm:$0xf]
  %v50 = vld [vmem:[%s0 + $0x8c] sm:$0xf]
  %v51 = vld [vmem:[%s0 + $0x90] sm:$0xf]
  %v52 = vld [vmem:[%s0 + $0x94] sm:$0xf]
  %v53 = vld [vmem:[%s0 + $0x98] sm:$0xf]
  %v54 = vld [vmem:[%s0 + $0x9c] sm:$0xf]
  %v55 = vld [vmem:[%s0 + $0xa0] sm:$0xf]
  %v56 = vld [vmem:[%s0 + $0xa4] sm:$0xf]
  %v57 = vld [vmem:[%s0 + $0xa8] sm:$0xf]
  %v58 = vld [vmem:[%s0 + $0xac] sm:$0xf]
  %v59 = vld [vmem:[%s0 + $0xb0] sm:$0xf]
  %v60 = vld [vmem:[%s0 + $0xb4] sm:$0xf]
  %v61 = vld [vmem:[%s0 + $0xb8] sm:$0xf]
  %v62 = vld [vmem:[%s0 + $0xbc] sm:$0xf]
  %v63 = vld [vmem:[%s0 + $0xc0] sm:$0xf]
  %v64 = vld [vmem:[%s0 + $0xc4] sm:$0xf]
  %v65 = vld [vmem:[%s0 + $0xc8] sm:$0xf]
  %v66 = vld [vmem:[%s0 + $0xcc] sm:$0xf]
  %v67 = vld [vmem:[%s0 + $0xd0] sm:$0xf]
  %v68 = vld [vmem:[%s0 + $0xd4] sm:$0xf]
  %v69 = vld [vmem:[%s0 + $0xd8] sm:$0xf]
  %v70 = vld [vmem:[%s0 + $0xdc] sm:$0xf]
  %v71 = vld [vmem:[%s0 + $0xe0] sm:$0xf]
  %v72 = vld [vmem:[%s0 + $0xe4] sm:$0xf]
  %v73 = vld [vmem:[%s0 + $0xe8] sm:$0xf]
  %v74 = vld [vmem:[%s0 + $0xec] sm:$0xf]
  %v75 = vld [vmem:[%s0 + $0xf0] sm:$0xf]
  %v76 = vld [vmem:[%s0 + $0xf4] sm:$0xf]
  %v77 = vld [vmem:[%s0 + $0xf8] sm:$0xf]
  %v78 = vld [vmem:[%s0 + $0xfc] sm:$0xf]
  %v79 = vld [vmem:[%s1] sm:$0xf]
  %v80 = vld [vmem:[%s1 + $0x4] sm:$0xf]
  %v81 = vld [vmem:[%s1 + $0x8] sm:$0xf]
  %v82 = vld [vmem:[%s1 + $0xc] sm:$0xf]
  %v83 = vld [vmem:[%s1 + $0x10] sm:$0xf]
  %v84 = vld [vmem:[%s1 + $0x14] sm:$0xf]
  %v85 = vld [vmem:[%s1 + $0x18] sm:$0xf]
  %v86 = vld [vmem:[%s1 + $0x1c] sm:$0xf]
  %v87 = vld [vmem:[%s1 + $0x20] sm:$0xf]
  %v88 = vld [vmem:[%s1 + $0x24] sm:$0xf]
  %v89 = vld [vmem:[%s1 + $0x28] sm:$0xf]
  %v90 = vld [vmem:[%s1 + $0x2c] sm:$0xf]
  %v91 = vld [vmem:[%s1 + $0x30] sm:$0xf]
  %v92 = vld [vmem:[%s1 + $0x34] sm:$0xf]
  %v93 = vld [vmem:[%s1 + $0x38] sm:$0xf]
  %v94 = vld [vmem:[%s1 + $0x3c] sm:$0xf]
  %v95 = vld [vmem:[%s2] sm:$0x1]
  %v97 = vlaneseq
  %v98 = vshrl.u32 %v97, 7
  %v99 = vsub.s32 0, %v98
  %v100 = vrot.slane %v95, %v99
  %v166 = vunpack.c.l.b16 %v15
  %v167 = vunpack.c.l.b16 %v16
  %v168 = vunpack.c.l.b16 %v17
  %v169 = vunpack.c.l.b16 %v18
  %v170 = vunpack.c.l.b16 %v19
  %v171 = vunpack.c.l.b16 %v20
  %v172 = vunpack.c.l.b16 %v21
  %v173 = vunpack.c.l.b16 %v22
  %v174 = vunpack.c.l.b16 %v23
  %v175 = vunpack.c.l.b16 %v24
  %v176 = vunpack.c.l.b16 %v25
  %v177 = vunpack.c.l.b16 %v26
  %v178 = vunpack.c.l.b16 %v27
  %v179 = vunpack.c.l.b16 %v28
  %v180 = vunpack.c.l.b16 %v29
  %v181 = vunpack.c.l.b16 %v30
  %v182 = vunpack.c.l.b16 %v31
  %v183 = vunpack.c.l.b16 %v32
  %v184 = vunpack.c.l.b16 %v33
  %v185 = vunpack.c.l.b16 %v34
  %v186 = vunpack.c.l.b16 %v35
  %v187 = vunpack.c.l.b16 %v36
  %v188 = vunpack.c.l.b16 %v37
  %v189 = vunpack.c.l.b16 %v38
  %v190 = vunpack.c.l.b16 %v39
  %v191 = vunpack.c.l.b16 %v40
  %v192 = vunpack.c.l.b16 %v41
  %v193 = vunpack.c.l.b16 %v42
  %v194 = vunpack.c.l.b16 %v43
  %v195 = vunpack.c.l.b16 %v44
  %v196 = vunpack.c.l.b16 %v45
  %v197 = vunpack.c.l.b16 %v46
  %v198 = vunpack.c.l.b16 %v47
  %v199 = vunpack.c.l.b16 %v48
  %v200 = vunpack.c.l.b16 %v49
  %v201 = vunpack.c.l.b16 %v50
  %v202 = vunpack.c.l.b16 %v51
  %v203 = vunpack.c.l.b16 %v52
  %v204 = vunpack.c.l.b16 %v53
  %v205 = vunpack.c.l.b16 %v54
  %v206 = vunpack.c.l.b16 %v55
  %v207 = vunpack.c.l.b16 %v56
  %v208 = vunpack.c.l.b16 %v57
  %v209 = vunpack.c.l.b16 %v58
  %v210 = vunpack.c.l.b16 %v59
  %v211 = vunpack.c.l.b16 %v60
  %v212 = vunpack.c.l.b16 %v61
  %v213 = vunpack.c.l.b16 %v62
  %v214 = vunpack.c.l.b16 %v63
  %v215 = vunpack.c.l.b16 %v64
  %v216 = vunpack.c.l.b16 %v65
  %v217 = vunpack.c.l.b16 %v66
  %v218 = vunpack.c.l.b16 %v67
  %v219 = vunpack.c.l.b16 %v68
  %v220 = vunpack.c.l.b16 %v69
  %v221 = vunpack.c.l.b16 %v70
  %v222 = vunpack.c.l.b16 %v71
  %v223 = vunpack.c.l.b16 %v72
  %v224 = vunpack.c.l.b16 %v73
  %v225 = vunpack.c.l.b16 %v74
  %v226 = vunpack.c.l.b16 %v75
  %v227 = vunpack.c.l.b16 %v76
  %v228 = vunpack.c.l.b16 %v77
  %v229 = vunpack.c.l.b16 %v78
  %v230 = vpack.c.b16 %v167, %v166
  %v231 = vpack.c.b16 %v169, %v168
  %v232 = vpack.c.b16 %v171, %v170
  %v233 = vpack.c.b16 %v173, %v172
  %v234 = vpack.c.b16 %v175, %v174
  %v235 = vpack.c.b16 %v177, %v176
  %v236 = vpack.c.b16 %v179, %v178
  %v237 = vpack.c.b16 %v181, %v180
  %v238 = vpack.c.b16 %v183, %v182
  %v239 = vpack.c.b16 %v185, %v184
  %v240 = vpack.c.b16 %v187, %v186
  %v241 = vpack.c.b16 %v189, %v188
  %v242 = vpack.c.b16 %v191, %v190
  %v243 = vpack.c.b16 %v193, %v192
  %v244 = vpack.c.b16 %v195, %v194
  %v245 = vpack.c.b16 %v197, %v196
  %v246 = vpack.c.b16 %v199, %v198
  %v247 = vpack.c.b16 %v201, %v200
  %v248 = vpack.c.b16 %v203, %v202
  %v249 = vpack.c.b16 %v205, %v204
  %v250 = vpack.c.b16 %v207, %v206
  %v251 = vpack.c.b16 %v209, %v208
  %v252 = vpack.c.b16 %v211, %v210
  %v253 = vpack.c.b16 %v213, %v212
  %v254 = vpack.c.b16 %v215, %v214
  %v255 = vpack.c.b16 %v217, %v216
  %v256 = vpack.c.b16 %v219, %v218
  %v257 = vpack.c.b16 %v221, %v220
  %v258 = vpack.c.b16 %v223, %v222
  %v259 = vpack.c.b16 %v225, %v224
  %v260 = vpack.c.b16 %v227, %v226
  %v261 = vpack.c.b16 %v229, %v228
  %v310 = vunpack.c.l.b16 %v79
  %v311 = vunpack.c.l.b16 %v80
  %v312 = vunpack.c.l.b16 %v81
  %v313 = vunpack.c.l.b16 %v82
  %v314 = vunpack.c.l.b16 %v83
  %v315 = vunpack.c.l.b16 %v84
  %v316 = vunpack.c.l.b16 %v85
  %v317 = vunpack.c.l.b16 %v86
  %v318 = vunpack.c.l.b16 %v87
  %v319 = vunpack.c.l.b16 %v88
  %v320 = vunpack.c.l.b16 %v89
  %v321 = vunpack.c.l.b16 %v90
  %v322 = vunpack.c.l.b16 %v91
  %v323 = vunpack.c.l.b16 %v92
  %v324 = vunpack.c.l.b16 %v93
  %v325 = vunpack.c.l.b16 %v94
  %v326 = vpack.c.b16 %v311, %v310
  %v327 = vpack.c.b16 %v313, %v312
  %v328 = vpack.c.b16 %v315, %v314
  %v329 = vpack.c.b16 %v317, %v316
  %v330 = vpack.c.b16 %v319, %v318
  %v331 = vpack.c.b16 %v321, %v320
  %v332 = vpack.c.b16 %v323, %v322
  %v333 = vpack.c.b16 %v325, %v324
  %342 = vmatprep.subr.bf16.mxu0 0
  %343 = vmatpush1.bf16.msra.mxu0 %v333
  %344 = vmatprep.subr.bf16.mxu0 0
  %345 = vmatpush1.bf16.msra.mxu0 %v332
  %346 = vmatprep.subr.bf16.mxu0 0
  %347 = vmatpush1.bf16.msra.mxu0 %v331
  %348 = vmatprep.subr.bf16.mxu0 0
  %349 = vmatpush1.bf16.msra.mxu0 %v330
  %350 = vmatprep.subr.bf16.mxu0 0
  %351 = vmatpush1.bf16.msra.mxu0 %v329
  %352 = vmatprep.subr.bf16.mxu0 0
  %353 = vmatpush1.bf16.msra.mxu0 %v328
  %354 = vmatprep.subr.bf16.mxu0 0
  %355 = vmatpush1.bf16.msra.mxu0 %v327
  %356 = vmatprep.subr.bf16.mxu0 0
  %357 = vmatpush1.bf16.msra.mxu0 %v326
  %358 = vmatprep.subr.bf16.mxu0 0
  %359 = vmatpush2.bf16.msra.mxu0 0
  %360 = vmatprep.subr.bf16.mxu0 0
  %361 = vmatpush2.bf16.msra.mxu0 0
  %362 = vmatprep.subr.bf16.mxu0 0
  %363 = vmatpush2.bf16.msra.mxu0 0
  %364 = vmatprep.subr.bf16.mxu0 0
  %365 = vmatpush2.bf16.msra.mxu0 0
  %366 = vmatprep.subr.bf16.mxu0 0
  %367 = vmatpush2.bf16.msra.mxu0 0
  %368 = vmatprep.subr.bf16.mxu0 0
  %369 = vmatpush2.bf16.msra.mxu0 0
  %370 = vmatprep.subr.bf16.mxu0 0
  %371 = vmatpush2.bf16.msra.mxu0 0
  %372 = vmatprep.subr.bf16.mxu0 0
  %373 = vmatpush2.bf16.msra.mxu0 0
  %374 = vmatprep.mubr.bf16.mxu0 0
  %375 = vmatmul.mubr.bf16.gmra.mxu0 %v230
  %v376 = vpop.f32.mrf.mxu0
  %v377 = vadd.f32 %v100, %v376
  %v378 = vpop.f32.mrf.mxu0
  %v379 = vpop.f32.mrf.mxu0
  %v380 = vadd.f32 %v100, %v379
  %v381 = vpop.f32.mrf.mxu0
  %382 = vmatprep.mubr.bf16.mxu0 0
  %383 = vmatmul.mubr.bf16.gmra.mxu0 %v231
  %v384 = vpop.f32.mrf.mxu0
  %v385 = vadd.f32 %v100, %v384
  %v386 = vpop.f32.mrf.mxu0
  %v387 = vpop.f32.mrf.mxu0
  %v388 = vadd.f32 %v100, %v387
  %v389 = vpop.f32.mrf.mxu0
  %390 = vmatprep.mubr.bf16.mxu0 0
  %391 = vmatmul.mubr.bf16.gmra.mxu0 %v232
  %v392 = vpop.f32.mrf.mxu0
  %v393 = vadd.f32 %v100, %v392
  %v394 = vpop.f32.mrf.mxu0
  %v395 = vpop.f32.mrf.mxu0
  %v396 = vadd.f32 %v100, %v395
  %v397 = vpop.f32.mrf.mxu0
  %398 = vmatprep.mubr.bf16.mxu0 0
  %399 = vmatmul.mubr.bf16.gmra.mxu0 %v233
  %v400 = vpop.f32.mrf.mxu0
  %v401 = vadd.f32 %v100, %v400
  %v402 = vpop.f32.mrf.mxu0
  %v403 = vpop.f32.mrf.mxu0
  %v404 = vadd.f32 %v100, %v403
  %v405 = vpop.f32.mrf.mxu0
  %406 = vmatprep.mubr.bf16.mxu0 0
  %407 = vmatmul.mubr.bf16.gmra.mxu0 %v234
  %v408 = vpop.f32.mrf.mxu0
  %v409 = vadd.f32 %v100, %v408
  %v410 = vpop.f32.mrf.mxu0
  %v411 = vpop.f32.mrf.mxu0
  %v412 = vadd.f32 %v100, %v411
  %v413 = vpop.f32.mrf.mxu0
  %414 = vmatprep.mubr.bf16.mxu0 0
  %415 = vmatmul.mubr.bf16.gmra.mxu0 %v235
  %v416 = vpop.f32.mrf.mxu0
  %v417 = vadd.f32 %v100, %v416
  %v418 = vpop.f32.mrf.mxu0
  %v419 = vpop.f32.mrf.mxu0
  %v420 = vadd.f32 %v100, %v419
  %v421 = vpop.f32.mrf.mxu0
  %422 = vmatprep.mubr.bf16.mxu0 0
  %423 = vmatmul.mubr.bf16.gmra.mxu0 %v236
  %v424 = vpop.f32.mrf.mxu0
  %v425 = vadd.f32 %v100, %v424
  %v426 = vpop.f32.mrf.mxu0
  %v427 = vpop.f32.mrf.mxu0
  %v428 = vadd.f32 %v100, %v427
  %v429 = vpop.f32.mrf.mxu0
  %430 = vmatprep.mubr.bf16.mxu0 0
  %431 = vmatmul.mubr.bf16.gmra.mxu0 %v237
  %v432 = vpop.f32.mrf.mxu0
  %v433 = vadd.f32 %v100, %v432
  %v434 = vpop.f32.mrf.mxu0
  %v435 = vpop.f32.mrf.mxu0
  %v436 = vadd.f32 %v100, %v435
  %v437 = vpop.f32.mrf.mxu0
  %438 = vmatprep.mubr.bf16.mxu0 0
  %439 = vmatmul.mubr.bf16.gmra.mxu0 %v238
  %v440 = vpop.f32.mrf.mxu0
  %v441 = vadd.f32 %v100, %v440
  %v442 = vpop.f32.mrf.mxu0
  %v443 = vpop.f32.mrf.mxu0
  %v444 = vadd.f32 %v100, %v443
  %v445 = vpop.f32.mrf.mxu0
  %446 = vmatprep.mubr.bf16.mxu0 0
  %447 = vmatmul.mubr.bf16.gmra.mxu0 %v239
  %v448 = vpop.f32.mrf.mxu0
  %v449 = vadd.f32 %v100, %v448
  %v450 = vpop.f32.mrf.mxu0
  %v451 = vpop.f32.mrf.mxu0
  %v452 = vadd.f32 %v100, %v451
  %v453 = vpop.f32.mrf.mxu0
  %454 = vmatprep.mubr.bf16.mxu0 0
  %455 = vmatmul.mubr.bf16.gmra.mxu0 %v240
  %v456 = vpop.f32.mrf.mxu0
  %v457 = vadd.f32 %v100, %v456
  %v458 = vpop.f32.mrf.mxu0
  %v459 = vpop.f32.mrf.mxu0
  %v460 = vadd.f32 %v100, %v459
  %v461 = vpop.f32.mrf.mxu0
  %462 = vmatprep.mubr.bf16.mxu0 0
  %463 = vmatmul.mubr.bf16.gmra.mxu0 %v241
  %v464 = vpop.f32.mrf.mxu0
  %v465 = vadd.f32 %v100, %v464
  %v466 = vpop.f32.mrf.mxu0
  %v467 = vpop.f32.mrf.mxu0
  %v468 = vadd.f32 %v100, %v467
  %v469 = vpop.f32.mrf.mxu0
  %470 = vmatprep.mubr.bf16.mxu0 0
  %471 = vmatmul.mubr.bf16.gmra.mxu0 %v242
  %v472 = vpop.f32.mrf.mxu0
  %v473 = vadd.f32 %v100, %v472
  %v474 = vpop.f32.mrf.mxu0
  %v475 = vpop.f32.mrf.mxu0
  %v476 = vadd.f32 %v100, %v475
  %v477 = vpop.f32.mrf.mxu0
  %478 = vmatprep.mubr.bf16.mxu0 0
  %479 = vmatmul.mubr.bf16.gmra.mxu0 %v243
  %v480 = vpop.f32.mrf.mxu0
  %v481 = vadd.f32 %v100, %v480
  %v482 = vpop.f32.mrf.mxu0
  %v483 = vpop.f32.mrf.mxu0
  %v484 = vadd.f32 %v100, %v483
  %v485 = vpop.f32.mrf.mxu0
  %486 = vmatprep.mubr.bf16.mxu0 0
  %487 = vmatmul.mubr.bf16.gmra.mxu0 %v244
  %v488 = vpop.f32.mrf.mxu0
  %v489 = vadd.f32 %v100, %v488
  %v490 = vpop.f32.mrf.mxu0
  %v491 = vpop.f32.mrf.mxu0
  %v492 = vadd.f32 %v100, %v491
  %v493 = vpop.f32.mrf.mxu0
  %494 = vmatprep.mubr.bf16.mxu0 0
  %495 = vmatmul.mubr.bf16.gmra.mxu0 %v245
  %v496 = vpop.f32.mrf.mxu0
  %v497 = vadd.f32 %v100, %v496
  %v498 = vpop.f32.mrf.mxu0
  %v499 = vpop.f32.mrf.mxu0
  %v500 = vadd.f32 %v100, %v499
  %v501 = vpop.f32.mrf.mxu0
  %502 = vmatprep.mubr.bf16.mxu0 0
  %503 = vmatmul.mubr.bf16.gmra.mxu0 %v246
  %v504 = vpop.f32.mrf.mxu0
  %v505 = vadd.f32 %v100, %v504
  %v506 = vpop.f32.mrf.mxu0
  %v507 = vpop.f32.mrf.mxu0
  %v508 = vadd.f32 %v100, %v507
  %v509 = vpop.f32.mrf.mxu0
  %510 = vmatprep.mubr.bf16.mxu0 0
  %511 = vmatmul.mubr.bf16.gmra.mxu0 %v247
  %v512 = vpop.f32.mrf.mxu0
  %v513 = vadd.f32 %v100, %v512
  %v514 = vpop.f32.mrf.mxu0
  %v515 = vpop.f32.mrf.mxu0
  %v516 = vadd.f32 %v100, %v515
  %v517 = vpop.f32.mrf.mxu0
  %518 = vmatprep.mubr.bf16.mxu0 0
  %519 = vmatmul.mubr.bf16.gmra.mxu0 %v248
  %v520 = vpop.f32.mrf.mxu0
  %v521 = vadd.f32 %v100, %v520
  %v522 = vpop.f32.mrf.mxu0
  %v523 = vpop.f32.mrf.mxu0
  %v524 = vadd.f32 %v100, %v523
  %v525 = vpop.f32.mrf.mxu0
  %526 = vmatprep.mubr.bf16.mxu0 0
  %527 = vmatmul.mubr.bf16.gmra.mxu0 %v249
  %v528 = vpop.f32.mrf.mxu0
  %v529 = vadd.f32 %v100, %v528
  %v530 = vpop.f32.mrf.mxu0
  %v531 = vpop.f32.mrf.mxu0
  %v532 = vadd.f32 %v100, %v531
  %v533 = vpop.f32.mrf.mxu0
  %534 = vmatprep.mubr.bf16.mxu0 0
  %535 = vmatmul.mubr.bf16.gmra.mxu0 %v250
  %v536 = vpop.f32.mrf.mxu0
  %v537 = vadd.f32 %v100, %v536
  %v538 = vpop.f32.mrf.mxu0
  %v539 = vpop.f32.mrf.mxu0
  %v540 = vadd.f32 %v100, %v539
  %v541 = vpop.f32.mrf.mxu0
  %542 = vmatprep.mubr.bf16.mxu0 0
  %543 = vmatmul.mubr.bf16.gmra.mxu0 %v251
  %v544 = vpop.f32.mrf.mxu0
  %v545 = vadd.f32 %v100, %v544
  %v546 = vpop.f32.mrf.mxu0
  %v547 = vpop.f32.mrf.mxu0
  %v548 = vadd.f32 %v100, %v547
  %v549 = vpop.f32.mrf.mxu0
  %550 = vmatprep.mubr.bf16.mxu0 0
  %551 = vmatmul.mubr.bf16.gmra.mxu0 %v252
  %v552 = vpop.f32.mrf.mxu0
  %v553 = vadd.f32 %v100, %v552
  %v554 = vpop.f32.mrf.mxu0
  %v555 = vpop.f32.mrf.mxu0
  %v556 = vadd.f32 %v100, %v555
  %v557 = vpop.f32.mrf.mxu0
  %558 = vmatprep.mubr.bf16.mxu0 0
  %559 = vmatmul.mubr.bf16.gmra.mxu0 %v253
  %v560 = vpop.f32.mrf.mxu0
  %v561 = vadd.f32 %v100, %v560
  %v562 = vpop.f32.mrf.mxu0
  %v563 = vpop.f32.mrf.mxu0
  %v564 = vadd.f32 %v100, %v563
  %v565 = vpop.f32.mrf.mxu0
  %566 = vmatprep.mubr.bf16.mxu0 0
  %567 = vmatmul.mubr.bf16.gmra.mxu0 %v254
  %v568 = vpop.f32.mrf.mxu0
  %v569 = vadd.f32 %v100, %v568
  %v570 = vpop.f32.mrf.mxu0
  %v571 = vpop.f32.mrf.mxu0
  %v572 = vadd.f32 %v100, %v571
  %v573 = vpop.f32.mrf.mxu0
  %574 = vmatprep.mubr.bf16.mxu0 0
  %575 = vmatmul.mubr.bf16.gmra.mxu0 %v255
  %v576 = vpop.f32.mrf.mxu0
  %v577 = vadd.f32 %v100, %v576
  %v578 = vpop.f32.mrf.mxu0
  %v579 = vpop.f32.mrf.mxu0
  %v580 = vadd.f32 %v100, %v579
  %v581 = vpop.f32.mrf.mxu0
  %582 = vmatprep.mubr.bf16.mxu0 0
  %583 = vmatmul.mubr.bf16.gmra.mxu0 %v256
  %v584 = vpop.f32.mrf.mxu0
  %v585 = vadd.f32 %v100, %v584
  %v586 = vpop.f32.mrf.mxu0
  %v587 = vpop.f32.mrf.mxu0
  %v588 = vadd.f32 %v100, %v587
  %v589 = vpop.f32.mrf.mxu0
  %590 = vmatprep.mubr.bf16.mxu0 0
  %591 = vmatmul.mubr.bf16.gmra.mxu0 %v257
  %v592 = vpop.f32.mrf.mxu0
  %v593 = vadd.f32 %v100, %v592
  %v594 = vpop.f32.mrf.mxu0
  %v595 = vpop.f32.mrf.mxu0
  %v596 = vadd.f32 %v100, %v595
  %v597 = vpop.f32.mrf.mxu0
  %598 = vmatprep.mubr.bf16.mxu0 0
  %599 = vmatmul.mubr.bf16.gmra.mxu0 %v258
  %v600 = vpop.f32.mrf.mxu0
  %v601 = vadd.f32 %v100, %v600
  %v602 = vpop.f32.mrf.mxu0
  %v603 = vpop.f32.mrf.mxu0
  %v604 = vadd.f32 %v100, %v603
  %v605 = vpop.f32.mrf.mxu0
  %606 = vmatprep.mubr.bf16.mxu0 0
  %607 = vmatmul.mubr.bf16.gmra.mxu0 %v259
  %v608 = vpop.f32.mrf.mxu0
  %v609 = vadd.f32 %v100, %v608
  %v610 = vpop.f32.mrf.mxu0
  %v611 = vpop.f32.mrf.mxu0
  %v612 = vadd.f32 %v100, %v611
  %v613 = vpop.f32.mrf.mxu0
  %614 = vmatprep.mubr.bf16.mxu0 0
  %615 = vmatmul.mubr.bf16.gmra.mxu0 %v260
  %v616 = vpop.f32.mrf.mxu0
  %v617 = vadd.f32 %v100, %v616
  %v618 = vpop.f32.mrf.mxu0
  %v619 = vpop.f32.mrf.mxu0
  %v620 = vadd.f32 %v100, %v619
  %v621 = vpop.f32.mrf.mxu0
  %622 = vmatprep.mubr.bf16.mxu0 0
  %623 = vmatmul.mubr.bf16.gmra.mxu0 %v261
  %v624 = vpop.f32.mrf.mxu0
  %v625 = vadd.f32 %v100, %v624
  %v626 = vpop.f32.mrf.mxu0
  %v627 = vpop.f32.mrf.mxu0
  %v628 = vadd.f32 %v100, %v627
  %v629 = vpop.f32.mrf.mxu0
  %630 = vdwg.mxu0
  %v631 = vmax.f32 %v377, 0.0
  %v632 = vmax.f32 %v380, 0.0
  %v633 = vmax.f32 %v385, 0.0
  %v634 = vmax.f32 %v388, 0.0
  %v635 = vmax.f32 %v393, 0.0
  %v636 = vmax.f32 %v396, 0.0
  %v637 = vmax.f32 %v401, 0.0
  %v638 = vmax.f32 %v404, 0.0
  %v639 = vmax.f32 %v409, 0.0
  %v640 = vmax.f32 %v412, 0.0
  %v641 = vmax.f32 %v417, 0.0
  %v642 = vmax.f32 %v420, 0.0
  %v643 = vmax.f32 %v425, 0.0
  %v644 = vmax.f32 %v428, 0.0
  %v645 = vmax.f32 %v433, 0.0
  %v646 = vmax.f32 %v436, 0.0
  %v647 = vmax.f32 %v441, 0.0
  %v648 = vmax.f32 %v444, 0.0
  %v649 = vmax.f32 %v449, 0.0
  %v650 = vmax.f32 %v452, 0.0
  %v651 = vmax.f32 %v457, 0.0
  %v652 = vmax.f32 %v460, 0.0
  %v653 = vmax.f32 %v465, 0.0
  %v654 = vmax.f32 %v468, 0.0
  %v655 = vmax.f32 %v473, 0.0
  %v656 = vmax.f32 %v476, 0.0
  %v657 = vmax.f32 %v481, 0.0
  %v658 = vmax.f32 %v484, 0.0
  %v659 = vmax.f32 %v489, 0.0
  %v660 = vmax.f32 %v492, 0.0
  %v661 = vmax.f32 %v497, 0.0
  %v662 = vmax.f32 %v500, 0.0
  %v663 = vmax.f32 %v505, 0.0
  %v664 = vmax.f32 %v508, 0.0
  %v665 = vmax.f32 %v513, 0.0
  %v666 = vmax.f32 %v516, 0.0
  %v667 = vmax.f32 %v521, 0.0
  %v668 = vmax.f32 %v524, 0.0
  %v669 = vmax.f32 %v529, 0.0
  %v670 = vmax.f32 %v532, 0.0
  %v671 = vmax.f32 %v537, 0.0
  %v672 = vmax.f32 %v540, 0.0
  %v673 = vmax.f32 %v545, 0.0
  %v674 = vmax.f32 %v548, 0.0
  %v675 = vmax.f32 %v553, 0.0
  %v676 = vmax.f32 %v556, 0.0
  %v677 = vmax.f32 %v561, 0.0
  %v678 = vmax.f32 %v564, 0.0
  %v679 = vmax.f32 %v569, 0.0
  %v680 = vmax.f32 %v572, 0.0
  %v681 = vmax.f32 %v577, 0.0
  %v682 = vmax.f32 %v580, 0.0
  %v683 = vmax.f32 %v585, 0.0
  %v684 = vmax.f32 %v588, 0.0
  %v685 = vmax.f32 %v593, 0.0
  %v686 = vmax.f32 %v596, 0.0
  %v687 = vmax.f32 %v601, 0.0
  %v688 = vmax.f32 %v604, 0.0
  %v689 = vmax.f32 %v609, 0.0
  %v690 = vmax.f32 %v612, 0.0
  %v691 = vmax.f32 %v617, 0.0
  %v692 = vmax.f32 %v620, 0.0
  %v693 = vmax.f32 %v625, 0.0
  %v694 = vmax.f32 %v628, 0.0
  %v695 = vpack.c.bf16 %v632, %v631
  %v696 = vpack.c.bf16 %v634, %v633
  %v697 = vpack.c.bf16 %v636, %v635
  %v698 = vpack.c.bf16 %v638, %v637
  %v699 = vpack.c.bf16 %v640, %v639
  %v700 = vpack.c.bf16 %v642, %v641
  %v701 = vpack.c.bf16 %v644, %v643
  %v702 = vpack.c.bf16 %v646, %v645
  %v703 = vpack.c.bf16 %v648, %v647
  %v704 = vpack.c.bf16 %v650, %v649
  %v705 = vpack.c.bf16 %v652, %v651
  %v706 = vpack.c.bf16 %v654, %v653
  %v707 = vpack.c.bf16 %v656, %v655
  %v708 = vpack.c.bf16 %v658, %v657
  %v709 = vpack.c.bf16 %v660, %v659
  %v710 = vpack.c.bf16 %v662, %v661
  %v711 = vpack.c.bf16 %v664, %v663
  %v712 = vpack.c.bf16 %v666, %v665
  %v713 = vpack.c.bf16 %v668, %v667
  %v714 = vpack.c.bf16 %v670, %v669
  %v715 = vpack.c.bf16 %v672, %v671
  %v716 = vpack.c.bf16 %v674, %v673
  %v717 = vpack.c.bf16 %v676, %v675
  %v718 = vpack.c.bf16 %v678, %v677
  %v719 = vpack.c.bf16 %v680, %v679
  %v720 = vpack.c.bf16 %v682, %v681
  %v721 = vpack.c.bf16 %v684, %v683
  %v722 = vpack.c.bf16 %v686, %v685
  %v723 = vpack.c.bf16 %v688, %v687
  %v724 = vpack.c.bf16 %v690, %v689
  %v725 = vpack.c.bf16 %v692, %v691
  %v726 = vpack.c.bf16 %v694, %v693
  %v759 = vunpack.c.l.b16 %v695
  %v760 = vunpack.c.h.b16 %v695
  %v761 = vunpack.c.l.b16 %v696
  %v762 = vunpack.c.h.b16 %v696
  %v763 = vunpack.c.l.b16 %v697
  %v764 = vunpack.c.h.b16 %v697
  %v765 = vunpack.c.l.b16 %v698
  %v766 = vunpack.c.h.b16 %v698
  %v767 = vunpack.c.l.b16 %v699
  %v768 = vunpack.c.h.b16 %v699
  %v769 = vunpack.c.l.b16 %v700
  %v770 = vunpack.c.h.b16 %v700
  %v771 = vunpack.c.l.b16 %v701
  %v772 = vunpack.c.h.b16 %v701
  %v773 = vunpack.c.l.b16 %v702
  %v774 = vunpack.c.h.b16 %v702
  %v775 = vunpack.c.l.b16 %v703
  %v776 = vunpack.c.h.b16 %v703
  %v777 = vunpack.c.l.b16 %v704
  %v778 = vunpack.c.h.b16 %v704
  %v779 = vunpack.c.l.b16 %v705
  %v780 = vunpack.c.h.b16 %v705
  %v781 = vunpack.c.l.b16 %v706
  %v782 = vunpack.c.h.b16 %v706
  %v783 = vunpack.c.l.b16 %v707
  %v784 = vunpack.c.h.b16 %v707
  %v785 = vunpack.c.l.b16 %v708
  %v786 = vunpack.c.h.b16 %v708
  %v787 = vunpack.c.l.b16 %v709
  %v788 = vunpack.c.h.b16 %v709
  %v789 = vunpack.c.l.b16 %v710
  %v790 = vunpack.c.h.b16 %v710
  %v791 = vunpack.c.l.b16 %v711
  %v792 = vunpack.c.h.b16 %v711
  %v793 = vunpack.c.l.b16 %v712
  %v794 = vunpack.c.h.b16 %v712
  %v795 = vunpack.c.l.b16 %v713
  %v796 = vunpack.c.h.b16 %v713
  %v797 = vunpack.c.l.b16 %v714
  %v798 = vunpack.c.h.b16 %v714
  %v799 = vunpack.c.l.b16 %v715
  %v800 = vunpack.c.h.b16 %v715
  %v801 = vunpack.c.l.b16 %v716
  %v802 = vunpack.c.h.b16 %v716
  %v803 = vunpack.c.l.b16 %v717
  %v804 = vunpack.c.h.b16 %v717
  %v805 = vunpack.c.l.b16 %v718
  %v806 = vunpack.c.h.b16 %v718
  %v807 = vunpack.c.l.b16 %v719
  %v808 = vunpack.c.h.b16 %v719
  %v809 = vunpack.c.l.b16 %v720
  %v810 = vunpack.c.h.b16 %v720
  %v811 = vunpack.c.l.b16 %v721
  %v812 = vunpack.c.h.b16 %v721
  %v813 = vunpack.c.l.b16 %v722
  %v814 = vunpack.c.h.b16 %v722
  %v815 = vunpack.c.l.b16 %v723
  %v816 = vunpack.c.h.b16 %v723
  %v817 = vunpack.c.l.b16 %v724
  %v818 = vunpack.c.h.b16 %v724
  %v819 = vunpack.c.l.b16 %v725
  %v820 = vunpack.c.h.b16 %v725
  %v821 = vunpack.c.l.b16 %v726
  %v822 = vunpack.c.h.b16 %v726
  %v823 = vpack.c.b16 %v759, %v759
  %v824 = vpack.c.b16 %v760, %v760
  %v825 = vpack.c.b16 %v761, %v761
  %v826 = vpack.c.b16 %v762, %v762
  %v827 = vpack.c.b16 %v763, %v763
  %v828 = vpack.c.b16 %v764, %v764
  %v829 = vpack.c.b16 %v765, %v765
  %v830 = vpack.c.b16 %v766, %v766
  %v831 = vpack.c.b16 %v767, %v767
  %v832 = vpack.c.b16 %v768, %v768
  %v833 = vpack.c.b16 %v769, %v769
  %v834 = vpack.c.b16 %v770, %v770
  %v835 = vpack.c.b16 %v771, %v771
  %v836 = vpack.c.b16 %v772, %v772
  %v837 = vpack.c.b16 %v773, %v773
  %v838 = vpack.c.b16 %v774, %v774
  %v839 = vpack.c.b16 %v775, %v775
  %v840 = vpack.c.b16 %v776, %v776
  %v841 = vpack.c.b16 %v777, %v777
  %v842 = vpack.c.b16 %v778, %v778
  %v843 = vpack.c.b16 %v779, %v779
  %v844 = vpack.c.b16 %v780, %v780
  %v845 = vpack.c.b16 %v781, %v781
  %v846 = vpack.c.b16 %v782, %v782
  %v847 = vpack.c.b16 %v783, %v783
  %v848 = vpack.c.b16 %v784, %v784
  %v849 = vpack.c.b16 %v785, %v785
  %v850 = vpack.c.b16 %v786, %v786
  %v851 = vpack.c.b16 %v787, %v787
  %v852 = vpack.c.b16 %v788, %v788
  %v853 = vpack.c.b16 %v789, %v789
  %v854 = vpack.c.b16 %v790, %v790
  %v855 = vpack.c.b16 %v791, %v791
  %v856 = vpack.c.b16 %v792, %v792
  %v857 = vpack.c.b16 %v793, %v793
  %v858 = vpack.c.b16 %v794, %v794
  %v859 = vpack.c.b16 %v795, %v795
  %v860 = vpack.c.b16 %v796, %v796
  %v861 = vpack.c.b16 %v797, %v797
  %v862 = vpack.c.b16 %v798, %v798
  %v863 = vpack.c.b16 %v799, %v799
  %v864 = vpack.c.b16 %v800, %v800
  %v865 = vpack.c.b16 %v801, %v801
  %v866 = vpack.c.b16 %v802, %v802
  %v867 = vpack.c.b16 %v803, %v803
  %v868 = vpack.c.b16 %v804, %v804
  %v869 = vpack.c.b16 %v805, %v805
  %v870 = vpack.c.b16 %v806, %v806
  %v871 = vpack.c.b16 %v807, %v807
  %v872 = vpack.c.b16 %v808, %v808
  %v873 = vpack.c.b16 %v809, %v809
  %v874 = vpack.c.b16 %v810, %v810
  %v875 = vpack.c.b16 %v811, %v811
  %v876 = vpack.c.b16 %v812, %v812
  %v877 = vpack.c.b16 %v813, %v813
  %v878 = vpack.c.b16 %v814, %v814
  %v879 = vpack.c.b16 %v815, %v815
  %v880 = vpack.c.b16 %v816, %v816
  %v881 = vpack.c.b16 %v817, %v817
  %v882 = vpack.c.b16 %v818, %v818
  %v883 = vpack.c.b16 %v819, %v819
  %v884 = vpack.c.b16 %v820, %v820
  %v885 = vpack.c.b16 %v821, %v821
  %v886 = vpack.c.b16 %v822, %v822
  %951 = vst [vmem:[%s3] sm:$0xf] %v823
  %952 = vst [vmem:[%s3 + $0x4] sm:$0xf] %v824
  %953 = vst [vmem:[%s3 + $0x8] sm:$0xf] %v825
  %954 = vst [vmem:[%s3 + $0xc] sm:$0xf] %v826
  %955 = vst [vmem:[%s3 + $0x10] sm:$0xf] %v827
  %956 = vst [vmem:[%s3 + $0x14] sm:$0xf] %v828
  %957 = vst [vmem:[%s3 + $0x18] sm:$0xf] %v829
  %958 = vst [vmem:[%s3 + $0x1c] sm:$0xf] %v830
  %959 = vst [vmem:[%s3 + $0x20] sm:$0xf] %v831
  %960 = vst [vmem:[%s3 + $0x24] sm:$0xf] %v832
  %961 = vst [vmem:[%s3 + $0x28] sm:$0xf] %v833
  %962 = vst [vmem:[%s3 + $0x2c] sm:$0xf] %v834
  %963 = vst [vmem:[%s3 + $0x30] sm:$0xf] %v835
  %964 = vst [vmem:[%s3 + $0x34] sm:$0xf] %v836
  %965 = vst [vmem:[%s3 + $0x38] sm:$0xf] %v837
  %966 = vst [vmem:[%s3 + $0x3c] sm:$0xf] %v838
  %967 = vst [vmem:[%s3 + $0x40] sm:$0xf] %v839
  %968 = vst [vmem:[%s3 + $0x44] sm:$0xf] %v840
  %969 = vst [vmem:[%s3 + $0x48] sm:$0xf] %v841
  %970 = vst [vmem:[%s3 + $0x4c] sm:$0xf] %v842
  %971 = vst [vmem:[%s3 + $0x50] sm:$0xf] %v843
  %972 = vst [vmem:[%s3 + $0x54] sm:$0xf] %v844
  %973 = vst [vmem:[%s3 + $0x58] sm:$0xf] %v845
  %974 = vst [vmem:[%s3 + $0x5c] sm:$0xf] %v846
  %975 = vst [vmem:[%s3 + $0x60] sm:$0xf] %v847
  %976 = vst [vmem:[%s3 + $0x64] sm:$0xf] %v848
  %977 = vst [vmem:[%s3 + $0x68] sm:$0xf] %v849
  %978 = vst [vmem:[%s3 + $0x6c] sm:$0xf] %v850
  %979 = vst [vmem:[%s3 + $0x70] sm:$0xf] %v851
  %980 = vst [vmem:[%s3 + $0x74] sm:$0xf] %v852
  %981 = vst [vmem:[%s3 + $0x78] sm:$0xf] %v853
  %982 = vst [vmem:[%s3 + $0x7c] sm:$0xf] %v854
  %983 = vst [vmem:[%s3 + $0x80] sm:$0xf] %v855
  %984 = vst [vmem:[%s3 + $0x84] sm:$0xf] %v856
  %985 = vst [vmem:[%s3 + $0x88] sm:$0xf] %v857
  %986 = vst [vmem:[%s3 + $0x8c] sm:$0xf] %v858
  %987 = vst [vmem:[%s3 + $0x90] sm:$0xf] %v859
  %988 = vst [vmem:[%s3 + $0x94] sm:$0xf] %v860
  %989 = vst [vmem:[%s3 + $0x98] sm:$0xf] %v861
  %990 = vst [vmem:[%s3 + $0x9c] sm:$0xf] %v862
  %991 = vst [vmem:[%s3 + $0xa0] sm:$0xf] %v863
  %992 = vst [vmem:[%s3 + $0xa4] sm:$0xf] %v864
  %993 = vst [vmem:[%s3 + $0xa8] sm:$0xf] %v865
  %994 = vst [vmem:[%s3 + $0xac] sm:$0xf] %v866
  %995 = vst [vmem:[%s3 + $0xb0] sm:$0xf] %v867
  %996 = vst [vmem:[%s3 + $0xb4] sm:$0xf] %v868
  %997 = vst [vmem:[%s3 + $0xb8] sm:$0xf] %v869
  %998 = vst [vmem:[%s3 + $0xbc] sm:$0xf] %v870
  %999 = vst [vmem:[%s3 + $0xc0] sm:$0xf] %v871
  %1000 = vst [vmem:[%s3 + $0xc4] sm:$0xf] %v872
  %1001 = vst [vmem:[%s3 + $0xc8] sm:$0xf] %v873
  %1002 = vst [vmem:[%s3 + $0xcc] sm:$0xf] %v874
  %1003 = vst [vmem:[%s3 + $0xd0] sm:$0xf] %v875
  %1004 = vst [vmem:[%s3 + $0xd4] sm:$0xf] %v876
  %1005 = vst [vmem:[%s3 + $0xd8] sm:$0xf] %v877
  %1006 = vst [vmem:[%s3 + $0xdc] sm:$0xf] %v878
  %1007 = vst [vmem:[%s3 + $0xe0] sm:$0xf] %v879
  %1008 = vst [vmem:[%s3 + $0xe4] sm:$0xf] %v880
  %1009 = vst [vmem:[%s3 + $0xe8] sm:$0xf] %v881
  %1010 = vst [vmem:[%s3 + $0xec] sm:$0xf] %v882
  %1011 = vst [vmem:[%s3 + $0xf0] sm:$0xf] %v883
  %1012 = vst [vmem:[%s3 + $0xf4] sm:$0xf] %v884
  %1013 = vst [vmem:[%s3 + $0xf8] sm:$0xf] %v885
  %1014 = vst [vmem:[%s3 + $0xfc] sm:$0xf] %v886
  // Predicated region
  $region14: #{resblock_forward.2} parent=0 // pred_check
    _
  $region15: #{resblock_forward.2} parent=0 // pred_check_branch
    %1016 = sbr.rel (0) target = $region17
  $region16: #{resblock_forward.2} parent=0 // pred_region
    _
  $region17: #{resblock_forward.2} parent=0 // pred_fallthru
    _
  // Predicated region
  $region18: #{resblock_forward.2} parent=0 // pred_check
    _
  $region19: #{resblock_forward.2} parent=0 // pred_check_branch
    %1018 = sbr.rel (0) target = $region21
  $region20: #{resblock_forward.2} parent=0 // pred_region
    _
  $region21: #{resblock_forward.2} parent=0 // pred_fallthru
    _

// kernel: resblock_forward.3
$region0: #{resblock_forward.3}
  #allocation0 [shape = 'u32[]', space=smem, size = 0x4, offset = 0x4, fixed_abs, tag = 'smem constant byte address 0x4 - core index']
  #allocation1 [shape = 'u32[144,128]{1,0:T(1,128)}', space=vmem, size = 0x12000, scoped, tag = 'internal scratch']
  %s0 = inlined_call_operand.vmem [shape: bf16[2,9,2,9,256], index: 0, kind: input, shape index: {}]
  %s1 = inlined_call_operand.vmem [shape: bf16[2,8,2,8,256], index: 1, kind: input, shape index: {}]
  %s2 = inlined_call_operand.vmem [shape: bf16[3,384,128], index: 2, kind: input, shape index: {}]
  %s3 = inlined_call_operand.vmem [shape: f32[1,128], index: 3, kind: input, shape index: {}]
  %s4 = inlined_call_operand.vmem [shape: bf16[128,128], index: 4, kind: input, shape index: {}]
  %s5 = inlined_call_operand.vmem [shape: f32[1,128], index: 5, kind: input, shape index: {}]
  %s6 = inlined_call_operand.vmem [shape: bf16[128,128], index: 6, kind: input, shape index: {}]
  %s7 = inlined_call_operand.vmem [shape: bf16[2,8,8,128], index: 7, kind: output, shape index: {}]
  %s8 = sld [smem:[#allocation0]]
  $region61: #{resblock_forward.3} parent=0
    _
  %s10 = ssub.s32 1, %s8
  %s11 = scalar_select 0, %s10, %s8
  loop: start=0, step=1, limit=4
  $region2: #{resblock_forward.3} parent=0 // loop_pre_header
    _
  $region3: #{resblock_forward.3} parent=0 // loop_header
    %s13 = sphi 0, %s17
    %p14 = scmp.ge.s32.totalorder %s13, 4
    %s20 = sphi 0, %s32
    %s21 = sphi 0, %s28
    %s22 = sphi 0, %s20
    %s23 = sphi 0, %s21
    %s24 = sphi 0, %s22
    %s25 = sphi 0, %s23
    %s35 = sphi 0, %s37
    %s38 = sphi 0, %s35
    %s39 = sphi 0, %s38
    %s55 = sphi 0, %s39
    %s63 = sphi 0, %s65
    %s66 = sphi 0, %s63
    %s67 = sphi 0, %s66
    %s83 = sphi 0, %s67
    %s87 = sphi 0, %s87
    %s89 = sphi 0, %s87
    %s90 = sphi 0, %s89
    %s104 = sphi 0, %s90
    %s108 = sphi 0, %s108
    %s110 = sphi 0, %s108
    %s111 = sphi 0, %s110
    %s125 = sphi 0, %s111
    %s129 = sphi 0, %s129
    %s131 = sphi 0, %s129
    %s132 = sphi 0, %s131
    %s146 = sphi 0, %s132
    %s150 = sphi 0, %s150
    %s152 = sphi 0, %s150
    %s153 = sphi 0, %s152
    %s167 = sphi 0, %s153
    %s171 = sphi 0, %s171
    %s173 = sphi 0, %s171
    %s174 = sphi 0, %s173
    %s188 = sphi 0, %s174
    %s196 = sphi 0, %s198
    %s199 = sphi 0, %s196
    %s200 = sphi 0, %s199
    %s216 = sphi 0, %s200
  $region4: #{resblock_forward.3} parent=0 // loop_header_branch
    %16 = sbr.rel (%p14) target = $region8
  $region5: #{resblock_forward.3} parent=0 // loop_body
    %s18 = ssub.s32 %s13, 1
    %s19 = ssub.s32 %s13, 2
    %s26 = sadd.s32 1, %s21
    %p27 = scmp.ge.s32.totalorder %s26, 1
    %s28 = scalar_select %p27, 0, %s26
    %s29 = sadd.s32 1, %s20
    %s30 = scalar_select %p27, %s29, %s20
    %p31 = scmp.ge.s32.totalorder %s30, 2
    %s32 = scalar_select %p31, 0, %s30
    %s33 = ssub.s32 %s20, %s32
    %p34 = scmp.eq.s32.totalorder %s33, 0
    %s36 = sadd.s32 %s35, 1
    %s37 = scalar_select %p34, %s35, %s36
    %p40 = pneg %p34
    %p41 = scmp.eq.s32.totalorder %s13, 1
    %p42 = por %p40, %p41
    %p43 = scmp.ne.s32.totalorder %s35, %s38
    %p44 = scmp.eq.s32.totalorder %s13, 0
    %p45 = por %p43, %p44
    %p46 = scmp.ne.s32.totalorder %s35, %s38
    %p47 = scmp.eq.s32.totalorder %s18, 1
    %p48 = por %p46, %p47
    %p49 = scmp.ne.s32.totalorder %s38, %s39
    %p50 = scmp.eq.s32.totalorder %s18, 0
    %p51 = por %p49, %p50
    %p52 = scmp.ne.s32.totalorder %s38, %s39
    %p53 = scmp.eq.s32.totalorder %s19, 1
    %p54 = por %p52, %p53
    %p56 = scmp.ne.s32.totalorder %s39, %s55
    %p57 = scmp.eq.s32.totalorder %s19, 0
    %p58 = por %p56, %p57
    %s59 = ssub.s32 %s20, %s32
    %s60 = ssub.s32 %s21, %s28
    %s61 = sor.u32 %s59, %s60
    %p62 = scmp.eq.s32.totalorder %s61, 0
    %s64 = sadd.s32 %s63, 1
    %s65 = scalar_select %p62, %s63, %s64
    %p68 = pneg %p62
    %p69 = scmp.eq.s32.totalorder %s13, 1
    %p70 = por %p68, %p69
    %p71 = scmp.ne.s32.totalorder %s63, %s66
    %p72 = scmp.eq.s32.totalorder %s13, 0
    %p73 = por %p71, %p72
    %p74 = scmp.ne.s32.totalorder %s63, %s66
    %p75 = scmp.eq.s32.totalorder %s18, 1
    %p76 = por %p74, %p75
    %p77 = scmp.ne.s32.totalorder %s66, %s67
    %p78 = scmp.eq.s32.totalorder %s18, 0
    %p79 = por %p77, %p78
    %p80 = scmp.ne.s32.totalorder %s66, %s67
    %p81 = scmp.eq.s32.totalorder %s19, 1
    %p82 = por %p80, %p81
    %p84 = scmp.ne.s32.totalorder %s67, %s83
    %p85 = scmp.eq.s32.totalorder %s19, 0
    %p86 = por %p84, %p85
    %s88 = sadd.s32 %s87, 1
    %p91 = scmp.eq.s32.totalorder %s13, 1
    %p92 = scmp.ne.s32.totalorder %s87, %s89
    %p93 = scmp.eq.s32.totalorder %s13, 0
    %p94 = por %p92, %p93
    %p95 = scmp.ne.s32.totalorder %s87, %s89
    %p96 = scmp.eq.s32.totalorder %s18, 1
    %p97 = por %p95, %p96
    %p98 = scmp.ne.s32.totalorder %s89, %s90
    %p99 = scmp.eq.s32.totalorder %s18, 0
    %p100 = por %p98, %p99
    %p101 = scmp.ne.s32.totalorder %s89, %s90
    %p102 = scmp.eq.s32.totalorder %s19, 1
    %p103 = por %p101, %p102
    %p105 = scmp.ne.s32.totalorder %s90, %s104
    %p106 = scmp.eq.s32.totalorder %s19, 0
    %p107 = por %p105, %p106
    %s109 = sadd.s32 %s108, 1
    %p112 = scmp.eq.s32.totalorder %s13, 1
    %p113 = scmp.ne.s32.totalorder %s108, %s110
    %p114 = scmp.eq.s32.totalorder %s13, 0
    %p115 = por %p113, %p114
    %p116 = scmp.ne.s32.totalorder %s108, %s110
    %p117 = scmp.eq.s32.totalorder %s18, 1
    %p118 = por %p116, %p117
    %p119 = scmp.ne.s32.totalorder %s110, %s111
    %p120 = scmp.eq.s32.totalorder %s18, 0
    %p121 = por %p119, %p120
    %p122 = scmp.ne.s32.totalorder %s110, %s111
    %p123 = scmp.eq.s32.totalorder %s19, 1
    %p124 = por %p122, %p123
    %p126 = scmp.ne.s32.totalorder %s111, %s125
    %p127 = scmp.eq.s32.totalorder %s19, 0
    %p128 = por %p126, %p127
    %s130 = sadd.s32 %s129, 1
    %p133 = scmp.eq.s32.totalorder %s13, 1
    %p134 = scmp.ne.s32.totalorder %s129, %s131
    %p135 = scmp.eq.s32.totalorder %s13, 0
    %p136 = por %p134, %p135
    %p137 = scmp.ne.s32.totalorder %s129, %s131
    %p138 = scmp.eq.s32.totalorder %s18, 1
    %p139 = por %p137, %p138
    %p140 = scmp.ne.s32.totalorder %s131, %s132
    %p141 = scmp.eq.s32.totalorder %s18, 0
    %p142 = por %p140, %p141
    %p143 = scmp.ne.s32.totalorder %s131, %s132
    %p144 = scmp.eq.s32.totalorder %s19, 1
    %p145 = por %p143, %p144
    %p147 = scmp.ne.s32.totalorder %s132, %s146
    %p148 = scmp.eq.s32.totalorder %s19, 0
    %p149 = por %p147, %p148
    %s151 = sadd.s32 %s150, 1
    %p154 = scmp.eq.s32.totalorder %s13, 1
    %p155 = scmp.ne.s32.totalorder %s150, %s152
    %p156 = scmp.eq.s32.totalorder %s13, 0
    %p157 = por %p155, %p156
    %p158 = scmp.ne.s32.totalorder %s150, %s152
    %p159 = scmp.eq.s32.totalorder %s18, 1
    %p160 = por %p158, %p159
    %p161 = scmp.ne.s32.totalorder %s152, %s153
    %p162 = scmp.eq.s32.totalorder %s18, 0
    %p163 = por %p161, %p162
    %p164 = scmp.ne.s32.totalorder %s152, %s153
    %p165 = scmp.eq.s32.totalorder %s19, 1
    %p166 = por %p164, %p165
    %p168 = scmp.ne.s32.totalorder %s153, %s167
    %p169 = scmp.eq.s32.totalorder %s19, 0
    %p170 = por %p168, %p169
    %s172 = sadd.s32 %s171, 1
    %p175 = scmp.eq.s32.totalorder %s13, 1
    %p176 = scmp.ne.s32.totalorder %s171, %s173
    %p177 = scmp.eq.s32.totalorder %s13, 0
    %p178 = por %p176, %p177
    %p179 = scmp.ne.s32.totalorder %s171, %s173
    %p180 = scmp.eq.s32.totalorder %s18, 1
    %p181 = por %p179, %p180
    %p182 = scmp.ne.s32.totalorder %s173, %s174
    %p183 = scmp.eq.s32.totalorder %s18, 0
    %p184 = por %p182, %p183
    %p185 = scmp.ne.s32.totalorder %s173, %s174
    %p186 = scmp.eq.s32.totalorder %s19, 1
    %p187 = por %p185, %p186
    %p189 = scmp.ne.s32.totalorder %s174, %s188
    %p190 = scmp.eq.s32.totalorder %s19, 0
    %p191 = por %p189, %p190
    %s192 = ssub.s32 %s20, %s32
    %s193 = ssub.s32 %s21, %s28
    %s194 = sor.u32 %s192, %s193
    %p195 = scmp.eq.s32.totalorder %s194, 0
    %s197 = sadd.s32 %s196, 1
    %s198 = scalar_select %p195, %s196, %s197
    %p201 = pneg %p195
    %p202 = scmp.eq.s32.totalorder %s13, 1
    %p203 = por %p201, %p202
    %p204 = scmp.ne.s32.totalorder %s196, %s199
    %p205 = scmp.eq.s32.totalorder %s13, 0
    %p206 = por %p204, %p205
    %p207 = scmp.ne.s32.totalorder %s196, %s199
    %p208 = scmp.eq.s32.totalorder %s18, 1
    %p209 = por %p207, %p208
    %p210 = scmp.ne.s32.totalorder %s199, %s200
    %p211 = scmp.eq.s32.totalorder %s18, 0
    %p212 = por %p210, %p211
    %p213 = scmp.ne.s32.totalorder %s199, %s200
    %p214 = scmp.eq.s32.totalorder %s19, 1
    %p215 = por %p213, %p214
    %p217 = scmp.ne.s32.totalorder %s200, %s216
    %p218 = scmp.eq.s32.totalorder %s19, 0
    %p219 = por %p217, %p218
    %p220 = scmp.le.s32.totalorder 1, %s13
    %p221 = scmp.lt.s32.totalorder %s13, 3
    %p222 = pnand %p220, %p221
    %p223 = pneg %p222
    // Predicated region
    $region9: #{resblock_forward.3} parent=5 // pred_check
      _
    $region10: #{resblock_forward.3} parent=5 // pred_check_branch
      %225 = sbr.rel (%p222) target = $region12
    $region11: #{resblock_forward.3} parent=5 // pred_region
      %s226 = ssub.s32 %s13, 1
      // Predicated region
      $region13: #{resblock_forward.3} parent=11 // pred_check
        %p227 = pneg %p100
      $region14: #{resblock_forward.3} parent=11 // pred_check_branch
        %229 = sbr.rel (%p227) target = $region16
      $region15: #{resblock_forward.3} parent=11 // pred_region
        _
      $region16: #{resblock_forward.3} parent=11 // pred_fallthru
        _
      // Predicated region
      $region17: #{resblock_forward.3} parent=11 // pred_check
        %p230 = pneg %p121
      $region18: #{resblock_forward.3} parent=11 // pred_check_branch
        %232 = sbr.rel (%p230) target = $region20
      $region19: #{resblock_forward.3} parent=11 // pred_region
        _
      $region20: #{resblock_forward.3} parent=11 // pred_fallthru
        _
      // Predicated region
      $region21: #{resblock_forward.3} parent=11 // pred_check
        %p233 = pneg %p142
      $region22: #{resblock_forward.3} parent=11 // pred_check_branch
        %235 = sbr.rel (%p233) target = $region24
      $region23: #{resblock_forward.3} parent=11 // pred_region
        _
      $region24: #{resblock_forward.3} parent=11 // pred_fallthru
        _
      // Predicated region
      $region25: #{resblock_forward.3} parent=11 // pred_check
        %p236 = pneg %p163
      $region26: #{resblock_forward.3} parent=11 // pred_check_branch
        %238 = sbr.rel (%p236) target = $region28
      $region27: #{resblock_forward.3} parent=11 // pred_region
        _
      $region28: #{resblock_forward.3} parent=11 // pred_fallthru
        _
      // Predicated region
      $region29: #{resblock_forward.3} parent=11 // pred_check
        %p239 = pneg %p184
      $region30: #{resblock_forward.3} parent=11 // pred_check_branch
        %241 = sbr.rel (%p239) target = $region32
      $region31: #{resblock_forward.3} parent=11 // pred_region
        _
      $region32: #{resblock_forward.3} parent=11 // pred_fallthru
        _
    $region12: #{resblock_forward.3} parent=5 // pred_fallthru
      _
    %p242 = scmp.lt.s32.totalorder %s13, 2
    // Predicated region
    $region33: #{resblock_forward.3} parent=5 // pred_check
      %p243 = pneg %p242
    $region34: #{resblock_forward.3} parent=5 // pred_check_branch
      %245 = sbr.rel (%p243) target = $region36
    $region35: #{resblock_forward.3} parent=5 // pred_region
      // Predicated region
      $region37: #{resblock_forward.3} parent=35 // pred_check
        %p246 = pneg %p45
      $region38: #{resblock_forward.3} parent=35 // pred_check_branch
        %248 = sbr.rel (%p246) target = $region40
      $region39: #{resblock_forward.3} parent=35 // pred_region
        %p249 = scmp.lt.s32.totalorder %s20, 1
        %s250 = scalar_select %p249, %s20, 1
        %s251 = smul.addr %s250, 72
        %s252 = smul.addr %s251, 4
        %s253 = scalar_lea.vmem %s0, %s252
      $region40: #{resblock_forward.3} parent=35 // pred_fallthru
        _
      // Predicated region
      $region41: #{resblock_forward.3} parent=35 // pred_check
        %p254 = pneg %p73
      $region42: #{resblock_forward.3} parent=35 // pred_check_branch
        %256 = sbr.rel (%p254) target = $region44
      $region43: #{resblock_forward.3} parent=35 // pred_region
        %s257 = smul.u32 8, %s21
        %p258 = scmp.lt.s32.totalorder %s20, 1
        %s259 = scalar_select %p258, %s20, 1
        %p260 = scmp.lt.s32.totalorder %s257, 7
        %s261 = scalar_select %p260, %s257, 7
        %s262 = smul.addr %s261, 4
        %s263 = smul.addr %s259, 32
        %s264 = sadd.s32 %s262, %s263
        %s265 = smul.addr %s264, 4
        %s266 = scalar_lea.vmem %s1, %s265
        %s267 = smul.u32 8, %s21
      $region44: #{resblock_forward.3} parent=35 // pred_fallthru
        _
    $region36: #{resblock_forward.3} parent=5 // pred_fallthru
      _
    %p268 = scmp.le.s32.totalorder 1, %s13
    %p269 = scmp.lt.s32.totalorder %s13, 3
    %p270 = pnand %p268, %p269
    %p271 = pneg %p270
    // Predicated region
    $region45: #{resblock_forward.3} parent=5 // pred_check
      _
    $region46: #{resblock_forward.3} parent=5 // pred_check_branch
      %273 = sbr.rel (%p270) target = $region48
    $region47: #{resblock_forward.3} parent=5 // pred_region
      %s274 = ssub.s32 %s13, 1
      %p275 = scmp.lt.s32.totalorder %s22, 1
      %s276 = scalar_select %p275, %s22, 1
      %s277 = smul.addr %s276, 72
      %s278 = smul.addr %s277, 4
      %s279 = scalar_lea.vmem %s0, %s278
      %p280 = pneg %p51
      %p281 = pneg %p48
      %s282 = smul.u32 8, %s23
      %p283 = scmp.lt.s32.totalorder %s22, 1
      %s284 = scalar_select %p283, %s22, 1
      %p285 = scmp.lt.s32.totalorder %s282, 7
      %s286 = scalar_select %p285, %s282, 7
      %s287 = smul.addr %s286, 4
      %s288 = smul.addr %s284, 32
      %s289 = sadd.s32 %s287, %s288
      %s290 = smul.addr %s289, 4
      %s291 = scalar_lea.vmem %s1, %s290
      %p292 = pneg %p79
      %p293 = pneg %p76
      %p294 = pneg %p100
      %p295 = pneg %p97
      %p296 = pneg %p121
      %p297 = pneg %p118
      %p298 = pneg %p142
      %p299 = pneg %p139
      %p300 = pneg %p163
      %p301 = pneg %p160
      %p302 = pneg %p184
      %p303 = pneg %p181
      %p304 = pneg %p212
      %p305 = pneg %p209
      %s306 = smul.u32 8, %s23
      %p307 = scmp.lt.s32.totalorder %s22, 1
      %s308 = scalar_select %p307, %s22, 1
      %p309 = scmp.lt.s32.totalorder %s306, 7
      %s310 = scalar_select %p309, %s306, 7
      %s311 = smul.addr %s308, 8
      %s312 = sadd.s32 %s310, %s311
      %s313 = smul.addr %s312, 4
      %s314 = scalar_lea.vmem %s7, %s313
      %p315 = scmp.lt.s32.totalorder %s22, 1
      %s316 = scalar_select %p315, %s22, 1
      %s317 = smul.addr %s316, 72
      %s318 = smul.addr %s317, 4
      %s319 = scalar_lea.vmem %s0, %s318
      %s320 = smul.u32 8, %s23
      %p321 = scmp.lt.s32.totalorder %s22, 1
      %s322 = scalar_select %p321, %s22, 1
      %p323 = scmp.lt.s32.totalorder %s320, 7
      %s324 = scalar_select %p323, %s320, 7
      %s325 = smul.addr %s324, 4
      %s326 = smul.addr %s322, 32
      %s327 = sadd.s32 %s325, %s326
      %s328 = smul.addr %s327, 4
      %s329 = scalar_lea.vmem %s1, %s328
      %s330 = smul.u32 8, %s23
      %s331 = smul.u32 8, %s23
      %p332 = scmp.lt.s32.totalorder %s22, 1
      %s333 = scalar_select %p332, %s22, 1
      %p334 = scmp.lt.s32.totalorder %s331, 7
      %s335 = scalar_select %p334, %s331, 7
      %s336 = smul.addr %s333, 8
      %s337 = sadd.s32 %s335, %s336
      %s338 = smul.addr %s337, 4
      %s339 = scalar_lea.vmem %s7, %s338
      %s340 = smul.u32 8, %s23
      %s342 = smul.u32 %s23, 8
      %s343 = smul.u32 %s342, 8
      %s344 = smul.addr %s343, 4
      %s345 = scalar_lea.vmem %s319, %s344
      %v346 = vld [vmem:[%s345] sm:$0xff]
      %v347 = vld [vmem:[%s345 + $0x8] sm:$0x11]
      %v348 = vld [vmem:[%s345 + $0x10] sm:$0xff]
      %v349 = vld [vmem:[%s345 + $0x18] sm:$0x11]
      %v350 = vld [vmem:[%s345 + $0x20] sm:$0xff]
      %v351 = vld [vmem:[%s345 + $0x28] sm:$0x11]
      %v352 = vld [vmem:[%s345 + $0x30] sm:$0xff]
      %v353 = vld [vmem:[%s345 + $0x38] sm:$0x11]
      %v354 = vld [vmem:[%s345 + $0x40] sm:$0xff]
      %v355 = vld [vmem:[%s345 + $0x48] sm:$0x11]
      %v356 = vld [vmem:[%s345 + $0x50] sm:$0xff]
      %v357 = vld [vmem:[%s345 + $0x58] sm:$0x11]
      %v358 = vld [vmem:[%s345 + $0x60] sm:$0xff]
      %v359 = vld [vmem:[%s345 + $0x68] sm:$0x11]
      %v360 = vld [vmem:[%s345 + $0x70] sm:$0xff]
      %v361 = vld [vmem:[%s345 + $0x78] sm:$0x11]
      %v362 = vld [vmem:[%s345 + $0x80] sm:$0xff]
      %v363 = vld [vmem:[%s345 + $0x88] sm:$0x11]
      %v364 = vld [vmem:[%s345 + $0x90] sm:$0xff]
      %v365 = vld [vmem:[%s345 + $0x98] sm:$0x11]
      %v366 = vld [vmem:[%s345 + $0xa0] sm:$0xff]
      %v367 = vld [vmem:[%s345 + $0xa8] sm:$0x11]
      %v368 = vld [vmem:[%s345 + $0xb0] sm:$0xff]
      %v369 = vld [vmem:[%s345 + $0xb8] sm:$0x11]
      %v370 = vld [vmem:[%s345 + $0xc0] sm:$0xff]
      %v371 = vld [vmem:[%s345 + $0xc8] sm:$0x11]
      %v372 = vld [vmem:[%s345 + $0xd0] sm:$0xff]
      %v373 = vld [vmem:[%s345 + $0xd8] sm:$0x11]
      %v374 = vld [vmem:[%s345 + $0xe0] sm:$0xff]
      %v375 = vld [vmem:[%s345 + $0xe8] sm:$0x11]
      %v376 = vld [vmem:[%s345 + $0xf0] sm:$0xff]
      %v377 = vld [vmem:[%s345 + $0xf8] sm:$0x11]
      %v378 = vld [vmem:[%s345 + $0x100] sm:$0xff]
      %v379 = vld [vmem:[%s345 + $0x108] sm:$0x11]
      %v388 = vunpack.c.l.b16 %v346
      %v389 = vunpack.c.h.b16 %v346
      %v390 = vunpack.c.l.b16 %v350
      %v391 = vunpack.c.h.b16 %v350
      %v392 = vunpack.c.l.b16 %v354
      %v393 = vunpack.c.h.b16 %v354
      %v394 = vunpack.c.l.b16 %v358
      %v395 = vunpack.c.h.b16 %v358
      %v396 = vunpack.c.l.b16 %v362
      %v397 = vunpack.c.h.b16 %v362
      %v398 = vunpack.c.l.b16 %v366
      %v399 = vunpack.c.h.b16 %v366
      %v400 = vunpack.c.l.b16 %v370
      %v401 = vunpack.c.h.b16 %v370
      %v402 = vunpack.c.l.b16 %v374
      %v403 = vunpack.c.h.b16 %v374
      %v412 = vunpack.c.l.b16 %v347
      %v413 = vunpack.c.l.b16 %v351
      %v414 = vunpack.c.l.b16 %v355
      %v415 = vunpack.c.l.b16 %v359
      %v416 = vunpack.c.l.b16 %v363
      %v417 = vunpack.c.l.b16 %v367
      %v418 = vunpack.c.l.b16 %v371
      %v419 = vunpack.c.l.b16 %v375
      %v420 = vpack.c.b16 %v412, %v388
      %v421 = vpack.c.b16 %v413, %v390
      %v422 = vpack.c.b16 %v414, %v392
      %v423 = vpack.c.b16 %v415, %v394
      %v424 = vpack.c.b16 %v416, %v396
      %v425 = vpack.c.b16 %v417, %v398
      %v426 = vpack.c.b16 %v418, %v400
      %v427 = vpack.c.b16 %v419, %v402
      %v429 = vshrl.u32 %v420, 16
      %v431 = vshll.u32 %v420, 16
      %v433 = vrot.slane %v431, 1
      %v434 = vor.u32 %v429, %v433
      %v436 = vshrl.u32 %v421, 16
      %v438 = vshll.u32 %v421, 16
      %v440 = vrot.slane %v438, 1
      %v441 = vor.u32 %v436, %v440
      %v443 = vshrl.u32 %v422, 16
      %v445 = vshll.u32 %v422, 16
      %v447 = vrot.slane %v445, 1
      %v448 = vor.u32 %v443, %v447
      %v450 = vshrl.u32 %v423, 16
      %v452 = vshll.u32 %v423, 16
      %v454 = vrot.slane %v452, 1
      %v455 = vor.u32 %v450, %v454
      %v457 = vshrl.u32 %v424, 16
      %v459 = vshll.u32 %v424, 16
      %v461 = vrot.slane %v459, 1
      %v462 = vor.u32 %v457, %v461
      %v464 = vshrl.u32 %v425, 16
      %v466 = vshll.u32 %v425, 16
      %v468 = vrot.slane %v466, 1
      %v469 = vor.u32 %v464, %v468
      %v471 = vshrl.u32 %v426, 16
      %v473 = vshll.u32 %v426, 16
      %v475 = vrot.slane %v473, 1
      %v476 = vor.u32 %v471, %v475
      %v478 = vshrl.u32 %v427, 16
      %v480 = vshll.u32 %v427, 16
      %v482 = vrot.slane %v480, 1
      %v483 = vor.u32 %v478, %v482
      %v484 = vunpack.c.l.b16 %v434
      %v485 = vunpack.c.l.b16 %v441
      %v486 = vunpack.c.l.b16 %v448
      %v487 = vunpack.c.l.b16 %v455
      %v488 = vunpack.c.l.b16 %v462
      %v489 = vunpack.c.l.b16 %v469
      %v490 = vunpack.c.l.b16 %v476
      %v491 = vunpack.c.l.b16 %v483
      %v492 = vld [vmem:[%s2] sm:$0xf]
      %v493 = vld [vmem:[%s2 + $0x4] sm:$0xf]
      %v494 = vld [vmem:[%s2 + $0x8] sm:$0xf]
      %v495 = vld [vmem:[%s2 + $0xc] sm:$0xf]
      %v496 = vld [vmem:[%s2 + $0x10] sm:$0xf]
      %v497 = vld [vmem:[%s2 + $0x14] sm:$0xf]
      %v498 = vld [vmem:[%s2 + $0x18] sm:$0xf]
      %v499 = vld [vmem:[%s2 + $0x1c] sm:$0xf]
      %v500 = vld [vmem:[%s2 + $0x20] sm:$0xf]
      %v501 = vld [vmem:[%s2 + $0x24] sm:$0xf]
      %v502 = vld [vmem:[%s2 + $0x28] sm:$0xf]
      %v503 = vld [vmem:[%s2 + $0x2c] sm:$0xf]
      %v504 = vld [vmem:[%s2 + $0x30] sm:$0xf]
      %v505 = vld [vmem:[%s2 + $0x34] sm:$0xf]
      %v506 = vld [vmem:[%s2 + $0x38] sm:$0xf]
      %v507 = vld [vmem:[%s2 + $0x3c] sm:$0xf]
      %v508 = vld [vmem:[%s2 + $0x40] sm:$0xf]
      %v509 = vld [vmem:[%s2 + $0x44] sm:$0xf]
      %v510 = vld [vmem:[%s2 + $0x48] sm:$0xf]
      %v511 = vld [vmem:[%s2 + $0x4c] sm:$0xf]
      %v512 = vld [vmem:[%s2 + $0x50] sm:$0xf]
      %v513 = vld [vmem:[%s2 + $0x54] sm:$0xf]
      %v514 = vld [vmem:[%s2 + $0x58] sm:$0xf]
      %v515 = vld [vmem:[%s2 + $0x5c] sm:$0xf]
      %v516 = vld [vmem:[%s2 + $0x60] sm:$0xf]
      %v517 = vld [vmem:[%s2 + $0x64] sm:$0xf]
      %v518 = vld [vmem:[%s2 + $0x68] sm:$0xf]
      %v519 = vld [vmem:[%s2 + $0x6c] sm:$0xf]
      %v520 = vld [vmem:[%s2 + $0x70] sm:$0xf]
      %v521 = vld [vmem:[%s2 + $0x74] sm:$0xf]
      %v522 = vld [vmem:[%s2 + $0x78] sm:$0xf]
      %v523 = vld [vmem:[%s2 + $0x7c] sm:$0xf]
      %v524 = vld [vmem:[%s2 + $0x80] sm:$0xf]
      %v525 = vld [vmem:[%s2 + $0x84] sm:$0xf]
      %v526 = vld [vmem:[%s2 + $0x88] sm:$0xf]
      %v527 = vld [vmem:[%s2 + $0x8c] sm:$0xf]
      %v528 = vld [vmem:[%s2 + $0x90] sm:$0xf]
      %v529 = vld [vmem:[%s2 + $0x94] sm:$0xf]
      %v530 = vld [vmem:[%s2 + $0x98] sm:$0xf]
      %v531 = vld [vmem:[%s2 + $0x9c] sm:$0xf]
      %v532 = vld [vmem:[%s2 + $0xa0] sm:$0xf]
      %v533 = vld [vmem:[%s2 + $0xa4] sm:$0xf]
      %v534 = vld [vmem:[%s2 + $0xa8] sm:$0xf]
      %v535 = vld [vmem:[%s2 + $0xac] sm:$0xf]
      %v536 = vld [vmem:[%s2 + $0xb0] sm:$0xf]
      %v537 = vld [vmem:[%s2 + $0xb4] sm:$0xf]
      %v538 = vld [vmem:[%s2 + $0xb8] sm:$0xf]
      %v539 = vld [vmem:[%s2 + $0xbc] sm:$0xf]
      %v548 = vunpack.c.l.b16 %v348
      %v549 = vunpack.c.h.b16 %v348
      %v550 = vunpack.c.l.b16 %v352
      %v551 = vunpack.c.h.b16 %v352
      %v552 = vunpack.c.l.b16 %v356
      %v553 = vunpack.c.h.b16 %v356
      %v554 = vunpack.c.l.b16 %v360
      %v555 = vunpack.c.h.b16 %v360
      %v556 = vunpack.c.l.b16 %v364
      %v557 = vunpack.c.h.b16 %v364
      %v558 = vunpack.c.l.b16 %v368
      %v559 = vunpack.c.h.b16 %v368
      %v560 = vunpack.c.l.b16 %v372
      %v561 = vunpack.c.h.b16 %v372
      %v562 = vunpack.c.l.b16 %v376
      %v563 = vunpack.c.h.b16 %v376
      %v572 = vunpack.c.l.b16 %v349
      %v573 = vunpack.c.l.b16 %v353
      %v574 = vunpack.c.l.b16 %v357
      %v575 = vunpack.c.l.b16 %v361
      %v576 = vunpack.c.l.b16 %v365
      %v577 = vunpack.c.l.b16 %v369
      %v578 = vunpack.c.l.b16 %v373
      %v579 = vunpack.c.l.b16 %v377
      %v580 = vpack.c.b16 %v572, %v548
      %v581 = vpack.c.b16 %v573, %v550
      %v582 = vpack.c.b16 %v574, %v552
      %v583 = vpack.c.b16 %v575, %v554
      %v584 = vpack.c.b16 %v576, %v556
      %v585 = vpack.c.b16 %v577, %v558
      %v586 = vpack.c.b16 %v578, %v560
      %v587 = vpack.c.b16 %v579, %v562
      %v589 = vshrl.u32 %v580, 16
      %v591 = vshll.u32 %v580, 16
      %v593 = vrot.slane %v591, 1
      %v594 = vor.u32 %v589, %v593
      %v596 = vshrl.u32 %v581, 16
      %v598 = vshll.u32 %v581, 16
      %v600 = vrot.slane %v598, 1
      %v601 = vor.u32 %v596, %v600
      %v603 = vshrl.u32 %v582, 16
      %v605 = vshll.u32 %v582, 16
      %v607 = vrot.slane %v605, 1
      %v608 = vor.u32 %v603, %v607
      %v610 = vshrl.u32 %v583, 16
      %v612 = vshll.u32 %v583, 16
      %v614 = vrot.slane %v612, 1
      %v615 = vor.u32 %v610, %v614
      %v617 = vshrl.u32 %v584, 16
      %v619 = vshll.u32 %v584, 16
      %v621 = vrot.slane %v619, 1
      %v622 = vor.u32 %v617, %v621
      %v624 = vshrl.u32 %v585, 16
      %v626 = vshll.u32 %v585, 16
      %v628 = vrot.slane %v626, 1
      %v629 = vor.u32 %v624, %v628
      %v631 = vshrl.u32 %v586, 16
      %v633 = vshll.u32 %v586, 16
      %v635 = vrot.slane %v633, 1
      %v636 = vor.u32 %v631, %v635
      %v638 = vshrl.u32 %v587, 16
      %v640 = vshll.u32 %v587, 16
      %v642 = vrot.slane %v640, 1
      %v643 = vor.u32 %v638, %v642
      %v644 = vunpack.c.l.b16 %v594
      %v645 = vunpack.c.l.b16 %v601
      %v646 = vunpack.c.l.b16 %v608
      %v647 = vunpack.c.l.b16 %v615
      %v648 = vunpack.c.l.b16 %v622
      %v649 = vunpack.c.l.b16 %v629
      %v650 = vunpack.c.l.b16 %v636
      %v651 = vunpack.c.l.b16 %v643
      %s652 = scalar_lea.vmem %s2, 192
      %v653 = vld [vmem:[%s652] sm:$0xf]
      %v654 = vld [vmem:[%s652 + $0x4] sm:$0xf]
      %v655 = vld [vmem:[%s652 + $0x8] sm:$0xf]
      %v656 = vld [vmem:[%s652 + $0xc] sm:$0xf]
      %v657 = vld [vmem:[%s652 + $0x10] sm:$0xf]
      %v658 = vld [vmem:[%s652 + $0x14] sm:$0xf]
      %v659 = vld [vmem:[%s652 + $0x18] sm:$0xf]
      %v660 = vld [vmem:[%s652 + $0x1c] sm:$0xf]
      %v661 = vld [vmem:[%s652 + $0x20] sm:$0xf]
      %v662 = vld [vmem:[%s652 + $0x24] sm:$0xf]
      %v663 = vld [vmem:[%s652 + $0x28] sm:$0xf]
      %v664 = vld [vmem:[%s652 + $0x2c] sm:$0xf]
      %v665 = vld [vmem:[%s652 + $0x30] sm:$0xf]
      %v666 = vld [vmem:[%s652 + $0x34] sm:$0xf]
      %v667 = vld [vmem:[%s652 + $0x38] sm:$0xf]
      %v668 = vld [vmem:[%s652 + $0x3c] sm:$0xf]
      %v669 = vld [vmem:[%s652 + $0x40] sm:$0xf]
      %v670 = vld [vmem:[%s652 + $0x44] sm:$0xf]
      %v671 = vld [vmem:[%s652 + $0x48] sm:$0xf]
      %v672 = vld [vmem:[%s652 + $0x4c] sm:$0xf]
      %v673 = vld [vmem:[%s652 + $0x50] sm:$0xf]
      %v674 = vld [vmem:[%s652 + $0x54] sm:$0xf]
      %v675 = vld [vmem:[%s652 + $0x58] sm:$0xf]
      %v676 = vld [vmem:[%s652 + $0x5c] sm:$0xf]
      %v677 = vld [vmem:[%s652 + $0x60] sm:$0xf]
      %v678 = vld [vmem:[%s652 + $0x64] sm:$0xf]
      %v679 = vld [vmem:[%s652 + $0x68] sm:$0xf]
      %v680 = vld [vmem:[%s652 + $0x6c] sm:$0xf]
      %v681 = vld [vmem:[%s652 + $0x70] sm:$0xf]
      %v682 = vld [vmem:[%s652 + $0x74] sm:$0xf]
      %v683 = vld [vmem:[%s652 + $0x78] sm:$0xf]
      %v684 = vld [vmem:[%s652 + $0x7c] sm:$0xf]
      %v685 = vld [vmem:[%s652 + $0x80] sm:$0xf]
      %v686 = vld [vmem:[%s652 + $0x84] sm:$0xf]
      %v687 = vld [vmem:[%s652 + $0x88] sm:$0xf]
      %v688 = vld [vmem:[%s652 + $0x8c] sm:$0xf]
      %v689 = vld [vmem:[%s652 + $0x90] sm:$0xf]
      %v690 = vld [vmem:[%s652 + $0x94] sm:$0xf]
      %v691 = vld [vmem:[%s652 + $0x98] sm:$0xf]
      %v692 = vld [vmem:[%s652 + $0x9c] sm:$0xf]
      %v693 = vld [vmem:[%s652 + $0xa0] sm:$0xf]
      %v694 = vld [vmem:[%s652 + $0xa4] sm:$0xf]
      %v695 = vld [vmem:[%s652 + $0xa8] sm:$0xf]
      %v696 = vld [vmem:[%s652 + $0xac] sm:$0xf]
      %v697 = vld [vmem:[%s652 + $0xb0] sm:$0xf]
      %v698 = vld [vmem:[%s652 + $0xb4] sm:$0xf]
      %v699 = vld [vmem:[%s652 + $0xb8] sm:$0xf]
      %v700 = vld [vmem:[%s652 + $0xbc] sm:$0xf]
      %v701 = vpack.c.b16 %v550, %v548
      %v702 = vpack.c.b16 %v551, %v549
      %v703 = vpack.c.b16 %v645, %v644
      %v704 = vpack.c.b16 %v554, %v552
      %v705 = vpack.c.b16 %v555, %v553
      %v706 = vpack.c.b16 %v647, %v646
      %v707 = vpack.c.b16 %v558, %v556
      %v708 = vpack.c.b16 %v559, %v557
      %v709 = vpack.c.b16 %v649, %v648
      %v710 = vpack.c.b16 %v562, %v560
      %v711 = vpack.c.b16 %v563, %v561
      %v712 = vpack.c.b16 %v651, %v650
      %v773 = vunpack.c.l.b16 %v653
      %v774 = vunpack.c.l.b16 %v654
      %v775 = vunpack.c.l.b16 %v655
      %v776 = vunpack.c.l.b16 %v656
      %v777 = vunpack.c.l.b16 %v657
      %v778 = vunpack.c.l.b16 %v658
      %v779 = vunpack.c.l.b16 %v659
      %v780 = vunpack.c.l.b16 %v660
      %v781 = vunpack.c.l.b16 %v661
      %v782 = vunpack.c.l.b16 %v662
      %v783 = vunpack.c.l.b16 %v663
      %v784 = vunpack.c.l.b16 %v664
      %v785 = vunpack.c.l.b16 %v665
      %v786 = vunpack.c.l.b16 %v666
      %v787 = vunpack.c.l.b16 %v667
      %v788 = vunpack.c.l.b16 %v668
      %v789 = vunpack.c.l.b16 %v669
      %v790 = vunpack.c.l.b16 %v670
      %v791 = vunpack.c.l.b16 %v671
      %v792 = vunpack.c.l.b16 %v672
      %v793 = vunpack.c.l.b16 %v673
      %v794 = vunpack.c.l.b16 %v674
      %v795 = vunpack.c.l.b16 %v675
      %v796 = vunpack.c.l.b16 %v676
      %v797 = vunpack.c.l.b16 %v677
      %v798 = vunpack.c.l.b16 %v678
      %v799 = vunpack.c.l.b16 %v679
      %v800 = vunpack.c.l.b16 %v680
      %v801 = vunpack.c.l.b16 %v681
      %v802 = vunpack.c.l.b16 %v682
      %v803 = vunpack.c.l.b16 %v683
      %v804 = vunpack.c.l.b16 %v684
      %v805 = vunpack.c.l.b16 %v685
      %v806 = vunpack.c.l.b16 %v686
      %v807 = vunpack.c.l.b16 %v687
      %v808 = vunpack.c.l.b16 %v688
      %v809 = vunpack.c.l.b16 %v689
      %v810 = vunpack.c.l.b16 %v690
      %v811 = vunpack.c.l.b16 %v691
      %v812 = vunpack.c.l.b16 %v692
      %v813 = vunpack.c.l.b16 %v693
      %v814 = vunpack.c.l.b16 %v694
      %v815 = vunpack.c.l.b16 %v695
      %v816 = vunpack.c.l.b16 %v696
      %v817 = vunpack.c.l.b16 %v697
      %v818 = vunpack.c.l.b16 %v698
      %v819 = vunpack.c.l.b16 %v699
      %v820 = vunpack.c.l.b16 %v700
      %v821 = vpack.c.b16 %v774, %v773
      %v822 = vpack.c.b16 %v776, %v775
      %v823 = vpack.c.b16 %v778, %v777
      %v824 = vpack.c.b16 %v780, %v779
      %v825 = vpack.c.b16 %v782, %v781
      %v826 = vpack.c.b16 %v784, %v783
      %v827 = vpack.c.b16 %v786, %v785
      %v828 = vpack.c.b16 %v788, %v787
      %v829 = vpack.c.b16 %v790, %v789
      %v830 = vpack.c.b16 %v792, %v791
      %v831 = vpack.c.b16 %v794, %v793
      %v832 = vpack.c.b16 %v796, %v795
      %v833 = vpack.c.b16 %v798, %v797
      %v834 = vpack.c.b16 %v800, %v799
      %v835 = vpack.c.b16 %v802, %v801
      %v836 = vpack.c.b16 %v804, %v803
      %v837 = vpack.c.b16 %v806, %v805
      %v838 = vpack.c.b16 %v808, %v807
      %v839 = vpack.c.b16 %v810, %v809
      %v840 = vpack.c.b16 %v812, %v811
      %v841 = vpack.c.b16 %v814, %v813
      %v842 = vpack.c.b16 %v816, %v815
      %v843 = vpack.c.b16 %v818, %v817
      %v844 = vpack.c.b16 %v820, %v819
      %869 = vmatprep.subr.bf16.mxu0 0
      %870 = vmatpush1.bf16.msra.mxu0 %v828
      %871 = vmatprep.subr.bf16.mxu0 0
      %872 = vmatpush1.bf16.msra.mxu0 %v827
      %873 = vmatprep.subr.bf16.mxu0 0
      %874 = vmatpush1.bf16.msra.mxu0 %v826
      %875 = vmatprep.subr.bf16.mxu0 0
      %876 = vmatpush1.bf16.msra.mxu0 %v825
      %877 = vmatprep.subr.bf16.mxu0 0
      %878 = vmatpush1.bf16.msra.mxu0 %v824
      %879 = vmatprep.subr.bf16.mxu0 0
      %880 = vmatpush1.bf16.msra.mxu0 %v823
      %881 = vmatprep.subr.bf16.mxu0 0
      %882 = vmatpush1.bf16.msra.mxu0 %v822
      %883 = vmatprep.subr.bf16.mxu0 0
      %884 = vmatpush1.bf16.msra.mxu0 %v821
      %885 = vmatprep.subr.bf16.mxu0 0
      %886 = vmatpush2.bf16.msra.mxu0 %v836
      %887 = vmatprep.subr.bf16.mxu0 0
      %888 = vmatpush2.bf16.msra.mxu0 %v835
      %889 = vmatprep.subr.bf16.mxu0 0
      %890 = vmatpush2.bf16.msra.mxu0 %v834
      %891 = vmatprep.subr.bf16.mxu0 0
      %892 = vmatpush2.bf16.msra.mxu0 %v833
      %893 = vmatprep.subr.bf16.mxu0 0
      %894 = vmatpush2.bf16.msra.mxu0 %v832
      %895 = vmatprep.subr.bf16.mxu0 0
      %896 = vmatpush2.bf16.msra.mxu0 %v831
      %897 = vmatprep.subr.bf16.mxu0 0
      %898 = vmatpush2.bf16.msra.mxu0 %v830
      %899 = vmatprep.subr.bf16.mxu0 0
      %900 = vmatpush2.bf16.msra.mxu0 %v829
      %901 = vmatprep.mubr.bf16.mxu0 %v702
      %902 = vmatmul.mubr.bf16.gmra.mxu0 %v701
      %v903 = vpop.f32.mrf.mxu0
      %v904 = vadd.f32 0.0, %v903
      %v905 = vpop.f32.mrf.mxu0
      %v906 = vpop.f32.mrf.mxu0
      %v907 = vadd.f32 0.0, %v906
      %v908 = vpop.f32.mrf.mxu0
      %909 = vmatprep.mubr.bf16.mxu0 %v705
      %910 = vmatmul.mubr.bf16.gmra.mxu0 %v704
      %v911 = vpop.f32.mrf.mxu0
      %v912 = vadd.f32 0.0, %v911
      %v913 = vpop.f32.mrf.mxu0
      %v914 = vpop.f32.mrf.mxu0
      %v915 = vadd.f32 0.0, %v914
      %v916 = vpop.f32.mrf.mxu0
      %917 = vmatprep.mubr.bf16.mxu0 %v708
      %918 = vmatmul.mubr.bf16.gmra.mxu0 %v707
      %v919 = vpop.f32.mrf.mxu0
      %v920 = vadd.f32 0.0, %v919
      %v921 = vpop.f32.mrf.mxu0
      %v922 = vpop.f32.mrf.mxu0
      %v923 = vadd.f32 0.0, %v922
      %v924 = vpop.f32.mrf.mxu0
      %925 = vmatprep.mubr.bf16.mxu0 %v711
      %926 = vmatmul.mubr.bf16.gmra.mxu0 %v710
      %v927 = vpop.f32.mrf.mxu0
      %v928 = vadd.f32 0.0, %v927
      %v929 = vpop.f32.mrf.mxu0
      %v930 = vpop.f32.mrf.mxu0
      %v931 = vadd.f32 0.0, %v930
      %v932 = vpop.f32.mrf.mxu0
      %933 = vdwg.mxu0
      %934 = vmatprep.subr.bf16.mxu0 0
      %935 = vmatpush1.bf16.msra.mxu0 %v844
      %936 = vmatprep.subr.bf16.mxu0 0
      %937 = vmatpush1.bf16.msra.mxu0 %v843
      %938 = vmatprep.subr.bf16.mxu0 0
      %939 = vmatpush1.bf16.msra.mxu0 %v842
      %940 = vmatprep.subr.bf16.mxu0 0
      %941 = vmatpush1.bf16.msra.mxu0 %v841
      %942 = vmatprep.subr.bf16.mxu0 0
      %943 = vmatpush1.bf16.msra.mxu0 %v840
      %944 = vmatprep.subr.bf16.mxu0 0
      %945 = vmatpush1.bf16.msra.mxu0 %v839
      %946 = vmatprep.subr.bf16.mxu0 0
      %947 = vmatpush1.bf16.msra.mxu0 %v838
      %948 = vmatprep.subr.bf16.mxu0 0
      %949 = vmatpush1.bf16.msra.mxu0 %v837
      %950 = vmatprep.subr.bf16.mxu0 0
      %951 = vmatpush2.bf16.msra.mxu0 0
      %952 = vmatprep.subr.bf16.mxu0 0
      %953 = vmatpush2.bf16.msra.mxu0 0
      %954 = vmatprep.subr.bf16.mxu0 0
      %955 = vmatpush2.bf16.msra.mxu0 0
      %956 = vmatprep.subr.bf16.mxu0 0
      %957 = vmatpush2.bf16.msra.mxu0 0
      %958 = vmatprep.subr.bf16.mxu0 0
      %959 = vmatpush2.bf16.msra.mxu0 0
      %960 = vmatprep.subr.bf16.mxu0 0
      %961 = vmatpush2.bf16.msra.mxu0 0
      %962 = vmatprep.subr.bf16.mxu0 0
      %963 = vmatpush2.bf16.msra.mxu0 0
      %964 = vmatprep.subr.bf16.mxu0 0
      %965 = vmatpush2.bf16.msra.mxu0 0
      %966 = vmatprep.mubr.bf16.mxu0 0
      %967 = vmatmul.mubr.bf16.gmra.mxu0 %v703
      %v968 = vpop.f32.mrf.mxu0
      %v969 = vadd.f32 %v904, %v968
      %v970 = vpop.f32.mrf.mxu0
      %v971 = vpop.f32.mrf.mxu0
      %v972 = vadd.f32 %v907, %v971
      %v973 = vpop.f32.mrf.mxu0
      %974 = vmatprep.mubr.bf16.mxu0 0
      %975 = vmatmul.mubr.bf16.gmra.mxu0 %v706
      %v976 = vpop.f32.mrf.mxu0
      %v977 = vadd.f32 %v912, %v976
      %v978 = vpop.f32.mrf.mxu0
      %v979 = vpop.f32.mrf.mxu0
      %v980 = vadd.f32 %v915, %v979
      %v981 = vpop.f32.mrf.mxu0
      %982 = vmatprep.mubr.bf16.mxu0 0
      %983 = vmatmul.mubr.bf16.gmra.mxu0 %v709
      %v984 = vpop.f32.mrf.mxu0
      %v985 = vadd.f32 %v920, %v984
      %v986 = vpop.f32.mrf.mxu0
      %v987 = vpop.f32.mrf.mxu0
      %v988 = vadd.f32 %v923, %v987
      %v989 = vpop.f32.mrf.mxu0
      %990 = vmatprep.mubr.bf16.mxu0 0
      %991 = vmatmul.mubr.bf16.gmra.mxu0 %v712
      %v992 = vpop.f32.mrf.mxu0
      %v993 = vadd.f32 %v928, %v992
      %v994 = vpop.f32.mrf.mxu0
      %v995 = vpop.f32.mrf.mxu0
      %v996 = vadd.f32 %v931, %v995
      %v997 = vpop.f32.mrf.mxu0
      %998 = vdwg.mxu0
      %v999 = vpack.c.b16 %v390, %v388
      %v1000 = vpack.c.b16 %v391, %v389
      %v1001 = vpack.c.b16 %v485, %v484
      %v1002 = vpack.c.b16 %v394, %v392
      %v1003 = vpack.c.b16 %v395, %v393
      %v1004 = vpack.c.b16 %v487, %v486
      %v1005 = vpack.c.b16 %v398, %v396
      %v1006 = vpack.c.b16 %v399, %v397
      %v1007 = vpack.c.b16 %v489, %v488
      %v1008 = vpack.c.b16 %v402, %v400
      %v1009 = vpack.c.b16 %v403, %v401
      %v1010 = vpack.c.b16 %v491, %v490
      %v1071 = vunpack.c.l.b16 %v492
      %v1072 = vunpack.c.l.b16 %v493
      %v1073 = vunpack.c.l.b16 %v494
      %v1074 = vunpack.c.l.b16 %v495
      %v1075 = vunpack.c.l.b16 %v496
      %v1076 = vunpack.c.l.b16 %v497
      %v1077 = vunpack.c.l.b16 %v498
      %v1078 = vunpack.c.l.b16 %v499
      %v1079 = vunpack.c.l.b16 %v500
      %v1080 = vunpack.c.l.b16 %v501
      %v1081 = vunpack.c.l.b16 %v502
      %v1082 = vunpack.c.l.b16 %v503
      %v1083 = vunpack.c.l.b16 %v504
      %v1084 = vunpack.c.l.b16 %v505
      %v1085 = vunpack.c.l.b16 %v506
      %v1086 = vunpack.c.l.b16 %v507
      %v1087 = vunpack.c.l.b16 %v508
      %v1088 = vunpack.c.l.b16 %v509
      %v1089 = vunpack.c.l.b16 %v510
      %v1090 = vunpack.c.l.b16 %v511
      %v1091 = vunpack.c.l.b16 %v512
      %v1092 = vunpack.c.l.b16 %v513
      %v1093 = vunpack.c.l.b16 %v514
      %v1094 = vunpack.c.l.b16 %v515
      %v1095 = vunpack.c.l.b16 %v516
      %v1096 = vunpack.c.l.b16 %v517
      %v1097 = vunpack.c.l.b16 %v518
      %v1098 = vunpack.c.l.b16 %v519
      %v1099 = vunpack.c.l.b16 %v520
      %v1100 = vunpack.c.l.b16 %v521
      %v1101 = vunpack.c.l.b16 %v522
      %v1102 = vunpack.c.l.b16 %v523
      %v1103 = vunpack.c.l.b16 %v524
      %v1104 = vunpack.c.l.b16 %v525
      %v1105 = vunpack.c.l.b16 %v526
      %v1106 = vunpack.c.l.b16 %v527
      %v1107 = vunpack.c.l.b16 %v528
      %v1108 = vunpack.c.l.b16 %v529
      %v1109 = vunpack.c.l.b16 %v530
      %v1110 = vunpack.c.l.b16 %v531
      %v1111 = vunpack.c.l.b16 %v532
      %v1112 = vunpack.c.l.b16 %v533
      %v1113 = vunpack.c.l.b16 %v534
      %v1114 = vunpack.c.l.b16 %v535
      %v1115 = vunpack.c.l.b16 %v536
      %v1116 = vunpack.c.l.b16 %v537
      %v1117 = vunpack.c.l.b16 %v538
      %v1118 = vunpack.c.l.b16 %v539
      %v1119 = vpack.c.b16 %v1072, %v1071
      %v1120 = vpack.c.b16 %v1074, %v1073
      %v1121 = vpack.c.b16 %v1076, %v1075
      %v1122 = vpack.c.b16 %v1078, %v1077
      %v1123 = vpack.c.b16 %v1080, %v1079
      %v1124 = vpack.c.b16 %v1082, %v1081
      %v1125 = vpack.c.b16 %v1084, %v1083
      %v1126 = vpack.c.b16 %v1086, %v1085
      %v1127 = vpack.c.b16 %v1088, %v1087
      %v1128 = vpack.c.b16 %v1090, %v1089
      %v1129 = vpack.c.b16 %v1092, %v1091
      %v1130 = vpack.c.b16 %v1094, %v1093
      %v1131 = vpack.c.b16 %v1096, %v1095
      %v1132 = vpack.c.b16 %v1098, %v1097
      %v1133 = vpack.c.b16 %v1100, %v1099
      %v1134 = vpack.c.b16 %v1102, %v1101
      %v1135 = vpack.c.b16 %v1104, %v1103
      %v1136 = vpack.c.b16 %v1106, %v1105
      %v1137 = vpack.c.b16 %v1108, %v1107
      %v1138 = vpack.c.b16 %v1110, %v1109
      %v1139 = vpack.c.b16 %v1112, %v1111
      %v1140 = vpack.c.b16 %v1114, %v1113
      %v1141 = vpack.c.b16 %v1116, %v1115
      %v1142 = vpack.c.b16 %v1118, %v1117
      %1167 = vmatprep.subr.bf16.mxu0 0
      %1168 = vmatpush1.bf16.msra.mxu0 %v1126
      %1169 = vmatprep.subr.bf16.mxu0 0
      %1170 = vmatpush1.bf16.msra.mxu0 %v1125
      %1171 = vmatprep.subr.bf16.mxu0 0
      %1172 = vmatpush1.bf16.msra.mxu0 %v1124
      %1173 = vmatprep.subr.bf16.mxu0 0
      %1174 = vmatpush1.bf16.msra.mxu0 %v1123
      %1175 = vmatprep.subr.bf16.mxu0 0
      %1176 = vmatpush1.bf16.msra.mxu0 %v1122
      %1177 = vmatprep.subr.bf16.mxu0 0
      %1178 = vmatpush1.bf16.msra.mxu0 %v1121
      %1179 = vmatprep.subr.bf16.mxu0 0
      %1180 = vmatpush1.bf16.msra.mxu0 %v1120
      %1181 = vmatprep.subr.bf16.mxu0 0
      %1182 = vmatpush1.bf16.msra.mxu0 %v1119
      %1183 = vmatprep.subr.bf16.mxu0 0
      %1184 = vmatpush2.bf16.msra.mxu0 %v1134
      %1185 = vmatprep.subr.bf16.mxu0 0
      %1186 = vmatpush2.bf16.msra.mxu0 %v1133
      %1187 = vmatprep.subr.bf16.mxu0 0
      %1188 = vmatpush2.bf16.msra.mxu0 %v1132
      %1189 = vmatprep.subr.bf16.mxu0 0
      %1190 = vmatpush2.bf16.msra.mxu0 %v1131
      %1191 = vmatprep.subr.bf16.mxu0 0
      %1192 = vmatpush2.bf16.msra.mxu0 %v1130
      %1193 = vmatprep.subr.bf16.mxu0 0
      %1194 = vmatpush2.bf16.msra.mxu0 %v1129
      %1195 = vmatprep.subr.bf16.mxu0 0
      %1196 = vmatpush2.bf16.msra.mxu0 %v1128
      %1197 = vmatprep.subr.bf16.mxu0 0
      %1198 = vmatpush2.bf16.msra.mxu0 %v1127
      %1199 = vmatprep.mubr.bf16.mxu0 %v1000
      %1200 = vmatmul.mubr.bf16.gmra.mxu0 %v999
      %v1201 = vpop.f32.mrf.mxu0
      %v1202 = vadd.f32 %v969, %v1201
      %v1203 = vpop.f32.mrf.mxu0
      %v1204 = vpop.f32.mrf.mxu0
      %v1205 = vadd.f32 %v972, %v1204
      %v1206 = vpop.f32.mrf.mxu0
      %1207 = vmatprep.mubr.bf16.mxu0 %v1003
      %1208 = vmatmul.mubr.bf16.gmra.mxu0 %v1002
      %v1209 = vpop.f32.mrf.mxu0
      %v1210 = vadd.f32 %v977, %v1209
      %v1211 = vpop.f32.mrf.mxu0
      %v1212 = vpop.f32.mrf.mxu0
      %v1213 = vadd.f32 %v980, %v1212
      %v1214 = vpop.f32.mrf.mxu0
      %1215 = vmatprep.mubr.bf16.mxu0 %v1006
      %1216 = vmatmul.mubr.bf16.gmra.mxu0 %v1005
      %v1217 = vpop.f32.mrf.mxu0
      %v1218 = vadd.f32 %v985, %v1217
      %v1219 = vpop.f32.mrf.mxu0
      %v1220 = vpop.f32.mrf.mxu0
      %v1221 = vadd.f32 %v988, %v1220
      %v1222 = vpop.f32.mrf.mxu0
      %1223 = vmatprep.mubr.bf16.mxu0 %v1009
      %1224 = vmatmul.mubr.bf16.gmra.mxu0 %v1008
      %v1225 = vpop.f32.mrf.mxu0
      %v1226 = vadd.f32 %v993, %v1225
      %v1227 = vpop.f32.mrf.mxu0
      %v1228 = vpop.f32.mrf.mxu0
      %v1229 = vadd.f32 %v996, %v1228
      %v1230 = vpop.f32.mrf.mxu0
      %1231 = vdwg.mxu0
      %1232 = vmatprep.subr.bf16.mxu0 0
      %1233 = vmatpush1.bf16.msra.mxu0 %v1142
      %1234 = vmatprep.subr.bf16.mxu0 0
      %1235 = vmatpush1.bf16.msra.mxu0 %v1141
      %1236 = vmatprep.subr.bf16.mxu0 0
      %1237 = vmatpush1.bf16.msra.mxu0 %v1140
      %1238 = vmatprep.subr.bf16.mxu0 0
      %1239 = vmatpush1.bf16.msra.mxu0 %v1139
      %1240 = vmatprep.subr.bf16.mxu0 0
      %1241 = vmatpush1.bf16.msra.mxu0 %v1138
      %1242 = vmatprep.subr.bf16.mxu0 0
      %1243 = vmatpush1.bf16.msra.mxu0 %v1137
      %1244 = vmatprep.subr.bf16.mxu0 0
      %1245 = vmatpush1.bf16.msra.mxu0 %v1136
      %1246 = vmatprep.subr.bf16.mxu0 0
      %1247 = vmatpush1.bf16.msra.mxu0 %v1135
      %1248 = vmatprep.subr.bf16.mxu0 0
      %1249 = vmatpush2.bf16.msra.mxu0 0
      %1250 = vmatprep.subr.bf16.mxu0 0
      %1251 = vmatpush2.bf16.msra.mxu0 0
      %1252 = vmatprep.subr.bf16.mxu0 0
      %1253 = vmatpush2.bf16.msra.mxu0 0
      %1254 = vmatprep.subr.bf16.mxu0 0
      %1255 = vmatpush2.bf16.msra.mxu0 0
      %1256 = vmatprep.subr.bf16.mxu0 0
      %1257 = vmatpush2.bf16.msra.mxu0 0
      %1258 = vmatprep.subr.bf16.mxu0 0
      %1259 = vmatpush2.bf16.msra.mxu0 0
      %1260 = vmatprep.subr.bf16.mxu0 0
      %1261 = vmatpush2.bf16.msra.mxu0 0
      %1262 = vmatprep.subr.bf16.mxu0 0
      %1263 = vmatpush2.bf16.msra.mxu0 0
      %1264 = vmatprep.mubr.bf16.mxu0 0
      %1265 = vmatmul.mubr.bf16.gmra.mxu0 %v1001
      %v1266 = vpop.f32.mrf.mxu0
      %v1267 = vadd.f32 %v1202, %v1266
      %v1268 = vpop.f32.mrf.mxu0
      %v1269 = vpop.f32.mrf.mxu0
      %v1270 = vadd.f32 %v1205, %v1269
      %v1271 = vpop.f32.mrf.mxu0
      %1272 = vmatprep.mubr.bf16.mxu0 0
      %1273 = vmatmul.mubr.bf16.gmra.mxu0 %v1004
      %v1274 = vpop.f32.mrf.mxu0
      %v1275 = vadd.f32 %v1210, %v1274
      %v1276 = vpop.f32.mrf.mxu0
      %v1277 = vpop.f32.mrf.mxu0
      %v1278 = vadd.f32 %v1213, %v1277
      %v1279 = vpop.f32.mrf.mxu0
      %1280 = vmatprep.mubr.bf16.mxu0 0
      %1281 = vmatmul.mubr.bf16.gmra.mxu0 %v1007
      %v1282 = vpop.f32.mrf.mxu0
      %v1283 = vadd.f32 %v1218, %v1282
      %v1284 = vpop.f32.mrf.mxu0
      %v1285 = vpop.f32.mrf.mxu0
      %v1286 = vadd.f32 %v1221, %v1285
      %v1287 = vpop.f32.mrf.mxu0
      %1288 = vmatprep.mubr.bf16.mxu0 0
      %1289 = vmatmul.mubr.bf16.gmra.mxu0 %v1010
      %v1290 = vpop.f32.mrf.mxu0
      %v1291 = vadd.f32 %v1226, %v1290
      %v1292 = vpop.f32.mrf.mxu0
      %v1293 = vpop.f32.mrf.mxu0
      %v1294 = vadd.f32 %v1229, %v1293
      %v1295 = vpop.f32.mrf.mxu0
      %1296 = vdwg.mxu0
      %v1298 = vunpack.c.l.b16 %v378
      %v1299 = vunpack.c.h.b16 %v378
      %v1301 = vunpack.c.l.b16 %v379
      %v1302 = vpack.c.b16 %v1301, %v1298
      %v1304 = vshrl.u32 %v1302, 16
      %v1306 = vshll.u32 %v1302, 16
      %v1308 = vrot.slane %v1306, 1
      %v1309 = vor.u32 %v1304, %v1308
      %v1310 = vunpack.c.l.b16 %v1309
      %s1311 = scalar_lea.vmem %s2, 384
      %v1312 = vld [vmem:[%s1311] sm:$0xf]
      %v1313 = vld [vmem:[%s1311 + $0x4] sm:$0xf]
      %v1314 = vld [vmem:[%s1311 + $0x8] sm:$0xf]
      %v1315 = vld [vmem:[%s1311 + $0xc] sm:$0xf]
      %v1316 = vld [vmem:[%s1311 + $0x10] sm:$0xf]
      %v1317 = vld [vmem:[%s1311 + $0x14] sm:$0xf]
      %v1318 = vld [vmem:[%s1311 + $0x18] sm:$0xf]
      %v1319 = vld [vmem:[%s1311 + $0x1c] sm:$0xf]
      %v1320 = vld [vmem:[%s1311 + $0x20] sm:$0xf]
      %v1321 = vld [vmem:[%s1311 + $0x24] sm:$0xf]
      %v1322 = vld [vmem:[%s1311 + $0x28] sm:$0xf]
      %v1323 = vld [vmem:[%s1311 + $0x2c] sm:$0xf]
      %v1324 = vld [vmem:[%s1311 + $0x30] sm:$0xf]
      %v1325 = vld [vmem:[%s1311 + $0x34] sm:$0xf]
      %v1326 = vld [vmem:[%s1311 + $0x38] sm:$0xf]
      %v1327 = vld [vmem:[%s1311 + $0x3c] sm:$0xf]
      %v1328 = vld [vmem:[%s1311 + $0x40] sm:$0xf]
      %v1329 = vld [vmem:[%s1311 + $0x44] sm:$0xf]
      %v1330 = vld [vmem:[%s1311 + $0x48] sm:$0xf]
      %v1331 = vld [vmem:[%s1311 + $0x4c] sm:$0xf]
      %v1332 = vld [vmem:[%s1311 + $0x50] sm:$0xf]
      %v1333 = vld [vmem:[%s1311 + $0x54] sm:$0xf]
      %v1334 = vld [vmem:[%s1311 + $0x58] sm:$0xf]
      %v1335 = vld [vmem:[%s1311 + $0x5c] sm:$0xf]
      %v1336 = vld [vmem:[%s1311 + $0x60] sm:$0xf]
      %v1337 = vld [vmem:[%s1311 + $0x64] sm:$0xf]
      %v1338 = vld [vmem:[%s1311 + $0x68] sm:$0xf]
      %v1339 = vld [vmem:[%s1311 + $0x6c] sm:$0xf]
      %v1340 = vld [vmem:[%s1311 + $0x70] sm:$0xf]
      %v1341 = vld [vmem:[%s1311 + $0x74] sm:$0xf]
      %v1342 = vld [vmem:[%s1311 + $0x78] sm:$0xf]
      %v1343 = vld [vmem:[%s1311 + $0x7c] sm:$0xf]
      %v1344 = vld [vmem:[%s1311 + $0x80] sm:$0xf]
      %v1345 = vld [vmem:[%s1311 + $0x84] sm:$0xf]
      %v1346 = vld [vmem:[%s1311 + $0x88] sm:$0xf]
      %v1347 = vld [vmem:[%s1311 + $0x8c] sm:$0xf]
      %v1348 = vld [vmem:[%s1311 + $0x90] sm:$0xf]
      %v1349 = vld [vmem:[%s1311 + $0x94] sm:$0xf]
      %v1350 = vld [vmem:[%s1311 + $0x98] sm:$0xf]
      %v1351 = vld [vmem:[%s1311 + $0x9c] sm:$0xf]
      %v1352 = vld [vmem:[%s1311 + $0xa0] sm:$0xf]
      %v1353 = vld [vmem:[%s1311 + $0xa4] sm:$0xf]
      %v1354 = vld [vmem:[%s1311 + $0xa8] sm:$0xf]
      %v1355 = vld [vmem:[%s1311 + $0xac] sm:$0xf]
      %v1356 = vld [vmem:[%s1311 + $0xb0] sm:$0xf]
      %v1357 = vld [vmem:[%s1311 + $0xb4] sm:$0xf]
      %v1358 = vld [vmem:[%s1311 + $0xb8] sm:$0xf]
      %v1359 = vld [vmem:[%s1311 + $0xbc] sm:$0xf]
      %v1360 = vpack.c.b16 %v392, %v390
      %v1361 = vpack.c.b16 %v393, %v391
      %v1362 = vpack.c.b16 %v486, %v485
      %v1363 = vpack.c.b16 %v396, %v394
      %v1364 = vpack.c.b16 %v397, %v395
      %v1365 = vpack.c.b16 %v488, %v487
      %v1366 = vpack.c.b16 %v400, %v398
      %v1367 = vpack.c.b16 %v401, %v399
      %v1368 = vpack.c.b16 %v490, %v489
      %v1369 = vpack.c.b16 %v1298, %v402
      %v1370 = vpack.c.b16 %v1299, %v403
      %v1371 = vpack.c.b16 %v1310, %v491
      %v1432 = vunpack.c.l.b16 %v1312
      %v1433 = vunpack.c.l.b16 %v1313
      %v1434 = vunpack.c.l.b16 %v1314
      %v1435 = vunpack.c.l.b16 %v1315
      %v1436 = vunpack.c.l.b16 %v1316
      %v1437 = vunpack.c.l.b16 %v1317
      %v1438 = vunpack.c.l.b16 %v1318
      %v1439 = vunpack.c.l.b16 %v1319
      %v1440 = vunpack.c.l.b16 %v1320
      %v1441 = vunpack.c.l.b16 %v1321
      %v1442 = vunpack.c.l.b16 %v1322
      %v1443 = vunpack.c.l.b16 %v1323
      %v1444 = vunpack.c.l.b16 %v1324
      %v1445 = vunpack.c.l.b16 %v1325
      %v1446 = vunpack.c.l.b16 %v1326
      %v1447 = vunpack.c.l.b16 %v1327
      %v1448 = vunpack.c.l.b16 %v1328
      %v1449 = vunpack.c.l.b16 %v1329
      %v1450 = vunpack.c.l.b16 %v1330
      %v1451 = vunpack.c.l.b16 %v1331
      %v1452 = vunpack.c.l.b16 %v1332
      %v1453 = vunpack.c.l.b16 %v1333
      %v1454 = vunpack.c.l.b16 %v1334
      %v1455 = vunpack.c.l.b16 %v1335
      %v1456 = vunpack.c.l.b16 %v1336
      %v1457 = vunpack.c.l.b16 %v1337
      %v1458 = vunpack.c.l.b16 %v1338
      %v1459 = vunpack.c.l.b16 %v1339
      %v1460 = vunpack.c.l.b16 %v1340
      %v1461 = vunpack.c.l.b16 %v1341
      %v1462 = vunpack.c.l.b16 %v1342
      %v1463 = vunpack.c.l.b16 %v1343
      %v1464 = vunpack.c.l.b16 %v1344
      %v1465 = vunpack.c.l.b16 %v1345
      %v1466 = vunpack.c.l.b16 %v1346
      %v1467 = vunpack.c.l.b16 %v1347
      %v1468 = vunpack.c.l.b16 %v1348
      %v1469 = vunpack.c.l.b16 %v1349
      %v1470 = vunpack.c.l.b16 %v1350
      %v1471 = vunpack.c.l.b16 %v1351
      %v1472 = vunpack.c.l.b16 %v1352
      %v1473 = vunpack.c.l.b16 %v1353
      %v1474 = vunpack.c.l.b16 %v1354
      %v1475 = vunpack.c.l.b16 %v1355
      %v1476 = vunpack.c.l.b16 %v1356
      %v1477 = vunpack.c.l.b16 %v1357
      %v1478 = vunpack.c.l.b16 %v1358
      %v1479 = vunpack.c.l.b16 %v1359
      %v1480 = vpack.c.b16 %v1433, %v1432
      %v1481 = vpack.c.b16 %v1435, %v1434
      %v1482 = vpack.c.b16 %v1437, %v1436
      %v1483 = vpack.c.b16 %v1439, %v1438
      %v1484 = vpack.c.b16 %v1441, %v1440
      %v1485 = vpack.c.b16 %v1443, %v1442
      %v1486 = vpack.c.b16 %v1445, %v1444
      %v1487 = vpack.c.b16 %v1447, %v1446
      %v1488 = vpack.c.b16 %v1449, %v1448
      %v1489 = vpack.c.b16 %v1451, %v1450
      %v1490 = vpack.c.b16 %v1453, %v1452
      %v1491 = vpack.c.b16 %v1455, %v1454
      %v1492 = vpack.c.b16 %v1457, %v1456
      %v1493 = vpack.c.b16 %v1459, %v1458
      %v1494 = vpack.c.b16 %v1461, %v1460
      %v1495 = vpack.c.b16 %v1463, %v1462
      %v1496 = vpack.c.b16 %v1465, %v1464
      %v1497 = vpack.c.b16 %v1467, %v1466
      %v1498 = vpack.c.b16 %v1469, %v1468
      %v1499 = vpack.c.b16 %v1471, %v1470
      %v1500 = vpack.c.b16 %v1473, %v1472
      %v1501 = vpack.c.b16 %v1475, %v1474
      %v1502 = vpack.c.b16 %v1477, %v1476
      %v1503 = vpack.c.b16 %v1479, %v1478
      %1528 = vmatprep.subr.bf16.mxu0 0
      %1529 = vmatpush1.bf16.msra.mxu0 %v1487
      %1530 = vmatprep.subr.bf16.mxu0 0
      %1531 = vmatpush1.bf16.msra.mxu0 %v1486
      %1532 = vmatprep.subr.bf16.mxu0 0
      %1533 = vmatpush1.bf16.msra.mxu0 %v1485
      %1534 = vmatprep.subr.bf16.mxu0 0
      %1535 = vmatpush1.bf16.msra.mxu0 %v1484
      %1536 = vmatprep.subr.bf16.mxu0 0
      %1537 = vmatpush1.bf16.msra.mxu0 %v1483
      %1538 = vmatprep.subr.bf16.mxu0 0
      %1539 = vmatpush1.bf16.msra.mxu0 %v1482
      %1540 = vmatprep.subr.bf16.mxu0 0
      %1541 = vmatpush1.bf16.msra.mxu0 %v1481
      %1542 = vmatprep.subr.bf16.mxu0 0
      %1543 = vmatpush1.bf16.msra.mxu0 %v1480
      %1544 = vmatprep.subr.bf16.mxu0 0
      %1545 = vmatpush2.bf16.msra.mxu0 %v1495
      %1546 = vmatprep.subr.bf16.mxu0 0
      %1547 = vmatpush2.bf16.msra.mxu0 %v1494
      %1548 = vmatprep.subr.bf16.mxu0 0
      %1549 = vmatpush2.bf16.msra.mxu0 %v1493
      %1550 = vmatprep.subr.bf16.mxu0 0
      %1551 = vmatpush2.bf16.msra.mxu0 %v1492
      %1552 = vmatprep.subr.bf16.mxu0 0
      %1553 = vmatpush2.bf16.msra.mxu0 %v1491
      %1554 = vmatprep.subr.bf16.mxu0 0
      %1555 = vmatpush2.bf16.msra.mxu0 %v1490
      %1556 = vmatprep.subr.bf16.mxu0 0
      %1557 = vmatpush2.bf16.msra.mxu0 %v1489
      %1558 = vmatprep.subr.bf16.mxu0 0
      %1559 = vmatpush2.bf16.msra.mxu0 %v1488
      %1560 = vmatprep.mubr.bf16.mxu0 %v1361
      %1561 = vmatmul.mubr.bf16.gmra.mxu0 %v1360
      %v1562 = vpop.f32.mrf.mxu0
      %v1563 = vadd.f32 0.0, %v1562
      %v1564 = vpop.f32.mrf.mxu0
      %v1565 = vpop.f32.mrf.mxu0
      %v1566 = vadd.f32 0.0, %v1565
      %v1567 = vpop.f32.mrf.mxu0
      %1568 = vmatprep.mubr.bf16.mxu0 %v1364
      %1569 = vmatmul.mubr.bf16.gmra.mxu0 %v1363
      %v1570 = vpop.f32.mrf.mxu0
      %v1571 = vadd.f32 0.0, %v1570
      %v1572 = vpop.f32.mrf.mxu0
      %v1573 = vpop.f32.mrf.mxu0
      %v1574 = vadd.f32 0.0, %v1573
      %v1575 = vpop.f32.mrf.mxu0
      %1576 = vmatprep.mubr.bf16.mxu0 %v1367
      %1577 = vmatmul.mubr.bf16.gmra.mxu0 %v1366
      %v1578 = vpop.f32.mrf.mxu0
      %v1579 = vadd.f32 0.0, %v1578
      %v1580 = vpop.f32.mrf.mxu0
      %v1581 = vpop.f32.mrf.mxu0
      %v1582 = vadd.f32 0.0, %v1581
      %v1583 = vpop.f32.mrf.mxu0
      %1584 = vmatprep.mubr.bf16.mxu0 %v1370
      %1585 = vmatmul.mubr.bf16.gmra.mxu0 %v1369
      %v1586 = vpop.f32.mrf.mxu0
      %v1587 = vadd.f32 0.0, %v1586
      %v1588 = vpop.f32.mrf.mxu0
      %v1589 = vpop.f32.mrf.mxu0
      %v1590 = vadd.f32 0.0, %v1589
      %v1591 = vpop.f32.mrf.mxu0
      %1592 = vdwg.mxu0
      %1593 = vmatprep.subr.bf16.mxu0 0
      %1594 = vmatpush1.bf16.msra.mxu0 %v1503
      %1595 = vmatprep.subr.bf16.mxu0 0
      %1596 = vmatpush1.bf16.msra.mxu0 %v1502
      %1597 = vmatprep.subr.bf16.mxu0 0
      %1598 = vmatpush1.bf16.msra.mxu0 %v1501
      %1599 = vmatprep.subr.bf16.mxu0 0
      %1600 = vmatpush1.bf16.msra.mxu0 %v1500
      %1601 = vmatprep.subr.bf16.mxu0 0
      %1602 = vmatpush1.bf16.msra.mxu0 %v1499
      %1603 = vmatprep.subr.bf16.mxu0 0
      %1604 = vmatpush1.bf16.msra.mxu0 %v1498
      %1605 = vmatprep.subr.bf16.mxu0 0
      %1606 = vmatpush1.bf16.msra.mxu0 %v1497
      %1607 = vmatprep.subr.bf16.mxu0 0
      %1608 = vmatpush1.bf16.msra.mxu0 %v1496
      %1609 = vmatprep.subr.bf16.mxu0 0
      %1610 = vmatpush2.bf16.msra.mxu0 0
      %1611 = vmatprep.subr.bf16.mxu0 0
      %1612 = vmatpush2.bf16.msra.mxu0 0
      %1613 = vmatprep.subr.bf16.mxu0 0
      %1614 = vmatpush2.bf16.msra.mxu0 0
      %1615 = vmatprep.subr.bf16.mxu0 0
      %1616 = vmatpush2.bf16.msra.mxu0 0
      %1617 = vmatprep.subr.bf16.mxu0 0
      %1618 = vmatpush2.bf16.msra.mxu0 0
      %1619 = vmatprep.subr.bf16.mxu0 0
      %1620 = vmatpush2.bf16.msra.mxu0 0
      %1621 = vmatprep.subr.bf16.mxu0 0
      %1622 = vmatpush2.bf16.msra.mxu0 0
      %1623 = vmatprep.subr.bf16.mxu0 0
      %1624 = vmatpush2.bf16.msra.mxu0 0
      %1625 = vmatprep.mubr.bf16.mxu0 0
      %1626 = vmatmul.mubr.bf16.gmra.mxu0 %v1362
      %v1627 = vpop.f32.mrf.mxu0
      %v1628 = vadd.f32 %v1563, %v1627
      %v1629 = vpop.f32.mrf.mxu0
      %v1630 = vpop.f32.mrf.mxu0
      %v1631 = vadd.f32 %v1566, %v1630
      %v1632 = vpop.f32.mrf.mxu0
      %1633 = vmatprep.mubr.bf16.mxu0 0
      %1634 = vmatmul.mubr.bf16.gmra.mxu0 %v1365
      %v1635 = vpop.f32.mrf.mxu0
      %v1636 = vadd.f32 %v1571, %v1635
      %v1637 = vpop.f32.mrf.mxu0
      %v1638 = vpop.f32.mrf.mxu0
      %v1639 = vadd.f32 %v1574, %v1638
      %v1640 = vpop.f32.mrf.mxu0
      %1641 = vmatprep.mubr.bf16.mxu0 0
      %1642 = vmatmul.mubr.bf16.gmra.mxu0 %v1368
      %v1643 = vpop.f32.mrf.mxu0
      %v1644 = vadd.f32 %v1579, %v1643
      %v1645 = vpop.f32.mrf.mxu0
      %v1646 = vpop.f32.mrf.mxu0
      %v1647 = vadd.f32 %v1582, %v1646
      %v1648 = vpop.f32.mrf.mxu0
      %1649 = vmatprep.mubr.bf16.mxu0 0
      %1650 = vmatmul.mubr.bf16.gmra.mxu0 %v1371
      %v1651 = vpop.f32.mrf.mxu0
      %v1652 = vadd.f32 %v1587, %v1651
      %v1653 = vpop.f32.mrf.mxu0
      %v1654 = vpop.f32.mrf.mxu0
      %v1655 = vadd.f32 %v1590, %v1654
      %v1656 = vpop.f32.mrf.mxu0
      %1657 = vdwg.mxu0
      %v1658 = vadd.f32 %v1267, %v1628
      %v1659 = vadd.f32 %v1270, %v1631
      %v1660 = vadd.f32 %v1275, %v1636
      %v1661 = vadd.f32 %v1278, %v1639
      %v1662 = vadd.f32 %v1283, %v1644
      %v1663 = vadd.f32 %v1286, %v1647
      %v1664 = vadd.f32 %v1291, %v1652
      %v1665 = vadd.f32 %v1294, %v1655
      %v1666 = vld [vmem:[%s3] sm:$0x1]
      %v1668 = vlaneseq
      %v1669 = vshrl.u32 %v1668, 7
      %v1670 = vsub.s32 0, %v1669
      %v1671 = vrot.slane %v1666, %v1670
      %v1673 = vadd.f32 %v1658, %v1671
      %v1674 = vadd.f32 %v1659, %v1671
      %v1675 = vadd.f32 %v1660, %v1671
      %v1676 = vadd.f32 %v1661, %v1671
      %v1677 = vadd.f32 %v1662, %v1671
      %v1678 = vadd.f32 %v1663, %v1671
      %v1679 = vadd.f32 %v1664, %v1671
      %v1680 = vadd.f32 %v1665, %v1671
      %v1681 = vmax.f32 %v1673, 0.0
      %v1682 = vmax.f32 %v1674, 0.0
      %v1683 = vmax.f32 %v1675, 0.0
      %v1684 = vmax.f32 %v1676, 0.0
      %v1685 = vmax.f32 %v1677, 0.0
      %v1686 = vmax.f32 %v1678, 0.0
      %v1687 = vmax.f32 %v1679, 0.0
      %v1688 = vmax.f32 %v1680, 0.0
      %v1689 = vpack.c.bf16 %v1682, %v1681
      %v1690 = vpack.c.bf16 %v1684, %v1683
      %v1691 = vpack.c.bf16 %v1686, %v1685
      %v1692 = vpack.c.bf16 %v1688, %v1687
      %v1693 = vld [vmem:[%s4] sm:$0xf]
      %v1694 = vld [vmem:[%s4 + $0x4] sm:$0xf]
      %v1695 = vld [vmem:[%s4 + $0x8] sm:$0xf]
      %v1696 = vld [vmem:[%s4 + $0xc] sm:$0xf]
      %v1697 = vld [vmem:[%s4 + $0x10] sm:$0xf]
      %v1698 = vld [vmem:[%s4 + $0x14] sm:$0xf]
      %v1699 = vld [vmem:[%s4 + $0x18] sm:$0xf]
      %v1700 = vld [vmem:[%s4 + $0x1c] sm:$0xf]
      %v1701 = vld [vmem:[%s4 + $0x20] sm:$0xf]
      %v1702 = vld [vmem:[%s4 + $0x24] sm:$0xf]
      %v1703 = vld [vmem:[%s4 + $0x28] sm:$0xf]
      %v1704 = vld [vmem:[%s4 + $0x2c] sm:$0xf]
      %v1705 = vld [vmem:[%s4 + $0x30] sm:$0xf]
      %v1706 = vld [vmem:[%s4 + $0x34] sm:$0xf]
      %v1707 = vld [vmem:[%s4 + $0x38] sm:$0xf]
      %v1708 = vld [vmem:[%s4 + $0x3c] sm:$0xf]
      %v1709 = vld [vmem:[%s329] sm:$0xff]
      %v1710 = vld [vmem:[%s329 + $0x8] sm:$0xff]
      %v1711 = vld [vmem:[%s329 + $0x10] sm:$0xff]
      %v1712 = vld [vmem:[%s329 + $0x18] sm:$0xff]
      %v1713 = vld [vmem:[%s329 + $0x20] sm:$0xff]
      %v1714 = vld [vmem:[%s329 + $0x28] sm:$0xff]
      %v1715 = vld [vmem:[%s329 + $0x30] sm:$0xff]
      %v1716 = vld [vmem:[%s329 + $0x38] sm:$0xff]
      %v1717 = vld [vmem:[%s329 + $0x40] sm:$0xff]
      %v1718 = vld [vmem:[%s329 + $0x48] sm:$0xff]
      %v1719 = vld [vmem:[%s329 + $0x50] sm:$0xff]
      %v1720 = vld [vmem:[%s329 + $0x58] sm:$0xff]
      %v1721 = vld [vmem:[%s329 + $0x60] sm:$0xff]
      %v1722 = vld [vmem:[%s329 + $0x68] sm:$0xff]
      %v1723 = vld [vmem:[%s329 + $0x70] sm:$0xff]
      %v1724 = vld [vmem:[%s329 + $0x78] sm:$0xff]
      %v1725 = vunpack.c.l.bf16 %v1709
      %v1726 = vunpack.c.h.bf16 %v1709
      %v1727 = vunpack.c.l.bf16 %v1710
      %v1728 = vunpack.c.h.bf16 %v1710
      %v1729 = vunpack.c.l.bf16 %v1711
      %v1730 = vunpack.c.h.bf16 %v1711
      %v1731 = vunpack.c.l.bf16 %v1712
      %v1732 = vunpack.c.h.bf16 %v1712
      %v1733 = vunpack.c.l.bf16 %v1713
      %v1734 = vunpack.c.h.bf16 %v1713
      %v1735 = vunpack.c.l.bf16 %v1714
      %v1736 = vunpack.c.h.bf16 %v1714
      %v1737 = vunpack.c.l.bf16 %v1715
      %v1738 = vunpack.c.h.bf16 %v1715
      %v1739 = vunpack.c.l.bf16 %v1716
      %v1740 = vunpack.c.h.bf16 %v1716
      %v1741 = vunpack.c.l.bf16 %v1717
      %v1742 = vunpack.c.h.bf16 %v1717
      %v1743 = vunpack.c.l.bf16 %v1718
      %v1744 = vunpack.c.h.bf16 %v1718
      %v1745 = vunpack.c.l.bf16 %v1719
      %v1746 = vunpack.c.h.bf16 %v1719
      %v1747 = vunpack.c.l.bf16 %v1720
      %v1748 = vunpack.c.h.bf16 %v1720
      %v1749 = vunpack.c.l.bf16 %v1721
      %v1750 = vunpack.c.h.bf16 %v1721
      %v1751 = vunpack.c.l.bf16 %v1722
      %v1752 = vunpack.c.h.bf16 %v1722
      %v1753 = vunpack.c.l.bf16 %v1723
      %v1754 = vunpack.c.h.bf16 %v1723
      %v1755 = vunpack.c.l.bf16 %v1724
      %v1756 = vunpack.c.h.bf16 %v1724
      %v1757 = vadd.f32 %v1725, %v1726
      %v1758 = vadd.f32 %v1729, %v1730
      %v1759 = vadd.f32 %v1733, %v1734
      %v1760 = vadd.f32 %v1737, %v1738
      %v1761 = vadd.f32 %v1741, %v1742
      %v1762 = vadd.f32 %v1745, %v1746
      %v1763 = vadd.f32 %v1749, %v1750
      %v1764 = vadd.f32 %v1753, %v1754
      %v1765 = vadd.f32 %v1757, %v1727
      %v1766 = vadd.f32 %v1758, %v1731
      %v1767 = vadd.f32 %v1759, %v1735
      %v1768 = vadd.f32 %v1760, %v1739
      %v1769 = vadd.f32 %v1761, %v1743
      %v1770 = vadd.f32 %v1762, %v1747
      %v1771 = vadd.f32 %v1763, %v1751
      %v1772 = vadd.f32 %v1764, %v1755
      %v1773 = vadd.f32 %v1765, %v1728
      %v1774 = vadd.f32 %v1766, %v1732
      %v1775 = vadd.f32 %v1767, %v1736
      %v1776 = vadd.f32 %v1768, %v1740
      %v1777 = vadd.f32 %v1769, %v1744
      %v1778 = vadd.f32 %v1770, %v1748
      %v1779 = vadd.f32 %v1771, %v1752
      %v1780 = vadd.f32 %v1772, %v1756
      %v1781 = vmul.f32 %v1773, 0.25
      %v1782 = vmul.f32 %v1774, 0.25
      %v1783 = vmul.f32 %v1775, 0.25
      %v1784 = vmul.f32 %v1776, 0.25
      %v1785 = vmul.f32 %v1777, 0.25
      %v1786 = vmul.f32 %v1778, 0.25
      %v1787 = vmul.f32 %v1779, 0.25
      %v1788 = vmul.f32 %v1780, 0.25
      %v1789 = vpack.c.bf16 %v1782, %v1781
      %v1790 = vpack.c.bf16 %v1784, %v1783
      %v1791 = vpack.c.bf16 %v1786, %v1785
      %v1792 = vpack.c.bf16 %v1788, %v1787
      %v1793 = vld [vmem:[%s6] sm:$0xf]
      %v1794 = vld [vmem:[%s6 + $0x4] sm:$0xf]
      %v1795 = vld [vmem:[%s6 + $0x8] sm:$0xf]
      %v1796 = vld [vmem:[%s6 + $0xc] sm:$0xf]
      %v1797 = vld [vmem:[%s6 + $0x10] sm:$0xf]
      %v1798 = vld [vmem:[%s6 + $0x14] sm:$0xf]
      %v1799 = vld [vmem:[%s6 + $0x18] sm:$0xf]
      %v1800 = vld [vmem:[%s6 + $0x1c] sm:$0xf]
      %v1801 = vld [vmem:[%s6 + $0x20] sm:$0xf]
      %v1802 = vld [vmem:[%s6 + $0x24] sm:$0xf]
      %v1803 = vld [vmem:[%s6 + $0x28] sm:$0xf]
      %v1804 = vld [vmem:[%s6 + $0x2c] sm:$0xf]
      %v1805 = vld [vmem:[%s6 + $0x30] sm:$0xf]
      %v1806 = vld [vmem:[%s6 + $0x34] sm:$0xf]
      %v1807 = vld [vmem:[%s6 + $0x38] sm:$0xf]
      %v1808 = vld [vmem:[%s6 + $0x3c] sm:$0xf]
      %v1825 = vunpack.c.l.b16 %v1793
      %v1826 = vunpack.c.l.b16 %v1794
      %v1827 = vunpack.c.l.b16 %v1795
      %v1828 = vunpack.c.l.b16 %v1796
      %v1829 = vunpack.c.l.b16 %v1797
      %v1830 = vunpack.c.l.b16 %v1798
      %v1831 = vunpack.c.l.b16 %v1799
      %v1832 = vunpack.c.l.b16 %v1800
      %v1833 = vunpack.c.l.b16 %v1801
      %v1834 = vunpack.c.l.b16 %v1802
      %v1835 = vunpack.c.l.b16 %v1803
      %v1836 = vunpack.c.l.b16 %v1804
      %v1837 = vunpack.c.l.b16 %v1805
      %v1838 = vunpack.c.l.b16 %v1806
      %v1839 = vunpack.c.l.b16 %v1807
      %v1840 = vunpack.c.l.b16 %v1808
      %v1841 = vpack.c.b16 %v1826, %v1825
      %v1842 = vpack.c.b16 %v1828, %v1827
      %v1843 = vpack.c.b16 %v1830, %v1829
      %v1844 = vpack.c.b16 %v1832, %v1831
      %v1845 = vpack.c.b16 %v1834, %v1833
      %v1846 = vpack.c.b16 %v1836, %v1835
      %v1847 = vpack.c.b16 %v1838, %v1837
      %v1848 = vpack.c.b16 %v1840, %v1839
      %1857 = vmatprep.subr.bf16.mxu0 0
      %1858 = vmatpush1.bf16.msra.mxu0 %v1848
      %1859 = vmatprep.subr.bf16.mxu0 0
      %1860 = vmatpush1.bf16.msra.mxu0 %v1847
      %1861 = vmatprep.subr.bf16.mxu0 0
      %1862 = vmatpush1.bf16.msra.mxu0 %v1846
      %1863 = vmatprep.subr.bf16.mxu0 0
      %1864 = vmatpush1.bf16.msra.mxu0 %v1845
      %1865 = vmatprep.subr.bf16.mxu0 0
      %1866 = vmatpush1.bf16.msra.mxu0 %v1844
      %1867 = vmatprep.subr.bf16.mxu0 0
      %1868 = vmatpush1.bf16.msra.mxu0 %v1843
      %1869 = vmatprep.subr.bf16.mxu0 0
      %1870 = vmatpush1.bf16.msra.mxu0 %v1842
      %1871 = vmatprep.subr.bf16.mxu0 0
      %1872 = vmatpush1.bf16.msra.mxu0 %v1841
      %1873 = vmatprep.subr.bf16.mxu0 0
      %1874 = vmatpush2.bf16.msra.mxu0 0
      %1875 = vmatprep.subr.bf16.mxu0 0
      %1876 = vmatpush2.bf16.msra.mxu0 0
      %1877 = vmatprep.subr.bf16.mxu0 0
      %1878 = vmatpush2.bf16.msra.mxu0 0
      %1879 = vmatprep.subr.bf16.mxu0 0
      %1880 = vmatpush2.bf16.msra.mxu0 0
      %1881 = vmatprep.subr.bf16.mxu0 0
      %1882 = vmatpush2.bf16.msra.mxu0 0
      %1883 = vmatprep.subr.bf16.mxu0 0
      %1884 = vmatpush2.bf16.msra.mxu0 0
      %1885 = vmatprep.subr.bf16.mxu0 0
      %1886 = vmatpush2.bf16.msra.mxu0 0
      %1887 = vmatprep.subr.bf16.mxu0 0
      %1888 = vmatpush2.bf16.msra.mxu0 0
      %1889 = vmatprep.mubr.bf16.mxu0 0
      %1890 = vmatmul.mubr.bf16.gmra.mxu0 %v1789
      %v1891 = vpop.f32.mrf.mxu0
      %v1892 = vadd.f32 0.0, %v1891
      %v1893 = vpop.f32.mrf.mxu0
      %v1894 = vpop.f32.mrf.mxu0
      %v1895 = vadd.f32 0.0, %v1894
      %v1896 = vpop.f32.mrf.mxu0
      %1897 = vmatprep.mubr.bf16.mxu0 0
      %1898 = vmatmul.mubr.bf16.gmra.mxu0 %v1790
      %v1899 = vpop.f32.mrf.mxu0
      %v1900 = vadd.f32 0.0, %v1899
      %v1901 = vpop.f32.mrf.mxu0
      %v1902 = vpop.f32.mrf.mxu0
      %v1903 = vadd.f32 0.0, %v1902
      %v1904 = vpop.f32.mrf.mxu0
      %1905 = vmatprep.mubr.bf16.mxu0 0
      %1906 = vmatmul.mubr.bf16.gmra.mxu0 %v1791
      %v1907 = vpop.f32.mrf.mxu0
      %v1908 = vadd.f32 0.0, %v1907
      %v1909 = vpop.f32.mrf.mxu0
      %v1910 = vpop.f32.mrf.mxu0
      %v1911 = vadd.f32 0.0, %v1910
      %v1912 = vpop.f32.mrf.mxu0
      %1913 = vmatprep.mubr.bf16.mxu0 0
      %1914 = vmatmul.mubr.bf16.gmra.mxu0 %v1792
      %v1915 = vpop.f32.mrf.mxu0
      %v1916 = vadd.f32 0.0, %v1915
      %v1917 = vpop.f32.mrf.mxu0
      %v1918 = vpop.f32.mrf.mxu0
      %v1919 = vadd.f32 0.0, %v1918
      %v1920 = vpop.f32.mrf.mxu0
      %1921 = vdwg.mxu0
      %v1938 = vunpack.c.l.b16 %v1693
      %v1939 = vunpack.c.l.b16 %v1694
      %v1940 = vunpack.c.l.b16 %v1695
      %v1941 = vunpack.c.l.b16 %v1696
      %v1942 = vunpack.c.l.b16 %v1697
      %v1943 = vunpack.c.l.b16 %v1698
      %v1944 = vunpack.c.l.b16 %v1699
      %v1945 = vunpack.c.l.b16 %v1700
      %v1946 = vunpack.c.l.b16 %v1701
      %v1947 = vunpack.c.l.b16 %v1702
      %v1948 = vunpack.c.l.b16 %v1703
      %v1949 = vunpack.c.l.b16 %v1704
      %v1950 = vunpack.c.l.b16 %v1705
      %v1951 = vunpack.c.l.b16 %v1706
      %v1952 = vunpack.c.l.b16 %v1707
      %v1953 = vunpack.c.l.b16 %v1708
      %v1954 = vpack.c.b16 %v1939, %v1938
      %v1955 = vpack.c.b16 %v1941, %v1940
      %v1956 = vpack.c.b16 %v1943, %v1942
      %v1957 = vpack.c.b16 %v1945, %v1944
      %v1958 = vpack.c.b16 %v1947, %v1946
      %v1959 = vpack.c.b16 %v1949, %v1948
      %v1960 = vpack.c.b16 %v1951, %v1950
      %v1961 = vpack.c.b16 %v1953, %v1952
      %1970 = vmatprep.subr.bf16.mxu0 0
      %1971 = vmatpush1.bf16.msra.mxu0 %v1961
      %1972 = vmatprep.subr.bf16.mxu0 0
      %1973 = vmatpush1.bf16.msra.mxu0 %v1960
      %1974 = vmatprep.subr.bf16.mxu0 0
      %1975 = vmatpush1.bf16.msra.mxu0 %v1959
      %1976 = vmatprep.subr.bf16.mxu0 0
      %1977 = vmatpush1.bf16.msra.mxu0 %v1958
      %1978 = vmatprep.subr.bf16.mxu0 0
      %1979 = vmatpush1.bf16.msra.mxu0 %v1957
      %1980 = vmatprep.subr.bf16.mxu0 0
      %1981 = vmatpush1.bf16.msra.mxu0 %v1956
      %1982 = vmatprep.subr.bf16.mxu0 0
      %1983 = vmatpush1.bf16.msra.mxu0 %v1955
      %1984 = vmatprep.subr.bf16.mxu0 0
      %1985 = vmatpush1.bf16.msra.mxu0 %v1954
      %1986 = vmatprep.subr.bf16.mxu0 0
      %1987 = vmatpush2.bf16.msra.mxu0 0
      %1988 = vmatprep.subr.bf16.mxu0 0
      %1989 = vmatpush2.bf16.msra.mxu0 0
      %1990 = vmatprep.subr.bf16.mxu0 0
      %1991 = vmatpush2.bf16.msra.mxu0 0
      %1992 = vmatprep.subr.bf16.mxu0 0
      %1993 = vmatpush2.bf16.msra.mxu0 0
      %1994 = vmatprep.subr.bf16.mxu0 0
      %1995 = vmatpush2.bf16.msra.mxu0 0
      %1996 = vmatprep.subr.bf16.mxu0 0
      %1997 = vmatpush2.bf16.msra.mxu0 0
      %1998 = vmatprep.subr.bf16.mxu0 0
      %1999 = vmatpush2.bf16.msra.mxu0 0
      %2000 = vmatprep.subr.bf16.mxu0 0
      %2001 = vmatpush2.bf16.msra.mxu0 0
      %2002 = vmatprep.mubr.bf16.mxu0 0
      %2003 = vmatmul.mubr.bf16.gmra.mxu0 %v1689
      %v2004 = vpop.f32.mrf.mxu0
      %v2005 = vadd.f32 %v1892, %v2004
      %v2006 = vpop.f32.mrf.mxu0
      %v2007 = vpop.f32.mrf.mxu0
      %v2008 = vadd.f32 %v1895, %v2007
      %v2009 = vpop.f32.mrf.mxu0
      %2010 = vmatprep.mubr.bf16.mxu0 0
      %2011 = vmatmul.mubr.bf16.gmra.mxu0 %v1690
      %v2012 = vpop.f32.mrf.mxu0
      %v2013 = vadd.f32 %v1900, %v2012
      %v2014 = vpop.f32.mrf.mxu0
      %v2015 = vpop.f32.mrf.mxu0
      %v2016 = vadd.f32 %v1903, %v2015
      %v2017 = vpop.f32.mrf.mxu0
      %2018 = vmatprep.mubr.bf16.mxu0 0
      %2019 = vmatmul.mubr.bf16.gmra.mxu0 %v1691
      %v2020 = vpop.f32.mrf.mxu0
      %v2021 = vadd.f32 %v1908, %v2020
      %v2022 = vpop.f32.mrf.mxu0
      %v2023 = vpop.f32.mrf.mxu0
      %v2024 = vadd.f32 %v1911, %v2023
      %v2025 = vpop.f32.mrf.mxu0
      %2026 = vmatprep.mubr.bf16.mxu0 0
      %2027 = vmatmul.mubr.bf16.gmra.mxu0 %v1692
      %v2028 = vpop.f32.mrf.mxu0
      %v2029 = vadd.f32 %v1916, %v2028
      %v2030 = vpop.f32.mrf.mxu0
      %v2031 = vpop.f32.mrf.mxu0
      %v2032 = vadd.f32 %v1919, %v2031
      %v2033 = vpop.f32.mrf.mxu0
      %2034 = vdwg.mxu0
      %v2035 = vld [vmem:[%s5] sm:$0x1]
      %v2037 = vlaneseq
      %v2038 = vshrl.u32 %v2037, 7
      %v2039 = vsub.s32 0, %v2038
      %v2040 = vrot.slane %v2035, %v2039
      %v2042 = vadd.f32 %v2005, %v2040
      %v2043 = vadd.f32 %v2008, %v2040
      %v2044 = vadd.f32 %v2013, %v2040
      %v2045 = vadd.f32 %v2016, %v2040
      %v2046 = vadd.f32 %v2021, %v2040
      %v2047 = vadd.f32 %v2024, %v2040
      %v2048 = vadd.f32 %v2029, %v2040
      %v2049 = vadd.f32 %v2032, %v2040
      %v2050 = vmax.f32 %v2042, 0.0
      %v2051 = vmax.f32 %v2043, 0.0
      %v2052 = vmax.f32 %v2044, 0.0
      %v2053 = vmax.f32 %v2045, 0.0
      %v2054 = vmax.f32 %v2046, 0.0
      %v2055 = vmax.f32 %v2047, 0.0
      %v2056 = vmax.f32 %v2048, 0.0
      %v2057 = vmax.f32 %v2049, 0.0
      %v2058 = vpack.c.bf16 %v2050, %v2050
      %v2059 = vpack.c.bf16 %v2051, %v2051
      %v2060 = vpack.c.bf16 %v2052, %v2052
      %v2061 = vpack.c.bf16 %v2053, %v2053
      %v2062 = vpack.c.bf16 %v2054, %v2054
      %v2063 = vpack.c.bf16 %v2055, %v2055
      %v2064 = vpack.c.bf16 %v2056, %v2056
      %v2065 = vpack.c.bf16 %v2057, %v2057
      %2066 = vst [vmem:[%s339] sm:$0xf] %v2058
      %2067 = vst [vmem:[%s339 + $0x4] sm:$0xf] %v2059
      %2068 = vst [vmem:[%s339 + $0x8] sm:$0xf] %v2060
      %2069 = vst [vmem:[%s339 + $0xc] sm:$0xf] %v2061
      %2070 = vst [vmem:[%s339 + $0x10] sm:$0xf] %v2062
      %2071 = vst [vmem:[%s339 + $0x14] sm:$0xf] %v2063
      %2072 = vst [vmem:[%s339 + $0x18] sm:$0xf] %v2064
      %2073 = vst [vmem:[%s339 + $0x1c] sm:$0xf] %v2065
      %s2074 = smul.u32 8, %s23
      %p2075 = scmp.lt.s32.totalorder %s22, 1
      %s2076 = scalar_select %p2075, %s22, 1
      %p2077 = scmp.lt.s32.totalorder %s2074, 7
      %s2078 = scalar_select %p2077, %s2074, 7
      %s2079 = smul.addr %s2076, 8
      %s2080 = sadd.s32 %s2078, %s2079
      %s2081 = smul.addr %s2080, 4
      %s2082 = scalar_lea.vmem %s7, %s2081
      // Predicated region
      $region49: #{resblock_forward.3} parent=47 // pred_check
        %p2083 = pneg %p209
      $region50: #{resblock_forward.3} parent=47 // pred_check_branch
        %2085 = sbr.rel (%p2083) target = $region52
      $region51: #{resblock_forward.3} parent=47 // pred_region
        %s2086 = smul.u32 8, %s23
      $region52: #{resblock_forward.3} parent=47 // pred_fallthru
        _
    $region48: #{resblock_forward.3} parent=5 // pred_fallthru
      _
    %p2087 = scmp.le.s32.totalorder 2, %s13
    // Predicated region
    $region53: #{resblock_forward.3} parent=5 // pred_check
      %p2088 = pneg %p2087
    $region54: #{resblock_forward.3} parent=5 // pred_check_branch
      %2090 = sbr.rel (%p2088) target = $region56
    $region55: #{resblock_forward.3} parent=5 // pred_region
      %s2091 = ssub.s32 %s13, 2
      // Predicated region
      $region57: #{resblock_forward.3} parent=55 // pred_check
        %p2092 = pneg %p215
      $region58: #{resblock_forward.3} parent=55 // pred_check_branch
        %2094 = sbr.rel (%p2092) target = $region60
      $region59: #{resblock_forward.3} parent=55 // pred_region
        %s2095 = smul.u32 8, %s25
        %p2096 = scmp.lt.s32.totalorder %s24, 1
        %s2097 = scalar_select %p2096, %s24, 1
        %p2098 = scmp.lt.s32.totalorder %s2095, 7
        %s2099 = scalar_select %p2098, %s2095, 7
        %s2100 = smul.addr %s2097, 8
        %s2101 = sadd.s32 %s2099, %s2100
        %s2102 = smul.addr %s2101, 4
        %s2103 = scalar_lea.vmem %s7, %s2102
      $region60: #{resblock_forward.3} parent=55 // pred_fallthru
        _
    $region56: #{resblock_forward.3} parent=5 // pred_fallthru
      _
  $region6: #{resblock_forward.3} parent=0 // loop_footer
    %s17 = sadd.s32 1, %s13
  $region7: #{resblock_forward.3} parent=0 // loop_footer_branch
    %12 = sbr.rel target = $region3
  $region8: #{resblock_forward.3} parent=0 // loop_exit
    _

</llo_original>
